<compile_context>
chip_gen: v7x
topology: tpu7x:2x2x1
jax: 0.10.0
libtpu: 0.0.40
codegen_flags: <defaults>
</compile_context>

<pallas_src>
import functools

import jax
import jax.numpy as jnp
from jax.experimental import pallas as pl
from jax.experimental.pallas import tpu as pltpu


# Single-buffer mode for grid-invariant blocks (weights/biases/emotion table).
_SINGLE_BUFFER = pl.Buffered(1) if hasattr(pl, "Buffered") else None


def _harmonicflow_kernel(*refs, use_emotion):
    if use_emotion:
        (x_ref,
         we1_ref, be1_ref, we2_ref, be2_ref,
         wl1_ref, bl1_ref, wl2_ref, bl2_ref,
         idx_ref, emo_tbl_ref,
         wd1_ref, bd1_ref, wd2_ref, bd2_ref,
         out_ref) = refs
    else:
        (x_ref,
         we1_ref, be1_ref, we2_ref, be2_ref,
         wl1_ref, bl1_ref, wl2_ref, bl2_ref,
         wd1_ref, bd1_ref, wd2_ref, bd2_ref,
         out_ref) = refs

    cdt = we1_ref.dtype                       # bf16 compute dtype (MXU native)

    x = x_ref[...].astype(cdt)

    # --- audio_encoder ---
    h = jnp.dot(x, we1_ref[...], preferred_element_type=jnp.float32) + be1_ref[...]
    h = jnp.maximum(h, 0.0).astype(cdt)
    h = jnp.dot(h, we2_ref[...], preferred_element_type=jnp.float32) + be2_ref[...]
    h = jnp.maximum(h, 0.0).astype(cdt)

    # --- latent_space.encode (modeled) ---
    z = jnp.dot(h, wl1_ref[...], preferred_element_type=jnp.float32) + bl1_ref[...]
    z = jnp.maximum(z, 0.0).astype(cdt)
    z = jnp.dot(z, wl2_ref[...], preferred_element_type=jnp.float32) + bl2_ref[...]

    # --- optional emotion embedding add: 3-level select tree over the 4-row table ---
    if use_emotion:
        idx = idx_ref[...]                    # (block_b, 1) int32
        table = emo_tbl_ref[...]              # (4, hidden) f32, VMEM-resident
        # TODO(synk): out-of-range indices clamp into {0..3} here instead of erroring.
        lo = jnp.where(idx == 1, table[1:2, :], table[0:1, :])   # (block_b, hidden)
        hi = jnp.where(idx == 3, table[3:4, :], table[2:3, :])   # (block_b, hidden)
        z = z + jnp.where(idx >= 2, hi, lo)                      # add in f32 before recast

    z = z.astype(cdt)

    # --- audio_decoder ---
    y = jnp.dot(z, wd1_ref[...], preferred_element_type=jnp.float32) + bd1_ref[...]
    y = jnp.maximum(y, 0.0).astype(cdt)
    y = jnp.dot(y, wd2_ref[...], preferred_element_type=jnp.float32) + bd2_ref[...]

    out_ref[...] = y.astype(out_ref.dtype)


def _default_block_b(B):
    """Batch tile.

    Weights are grid-invariant, so splitting the batch only adds per-step overhead
    until the x/out tile itself gets large.  Keep one grid step up to 512 rows;
    beyond that tile by 512/256/128 (multiples of the MXU row count: 256 on
    v6e/v7x, 128 on v5e)."""
    if B <= 512:
        return B
    for cand in (512, 256, 128):
        if B % cand == 0:
            return cand
    return B  # no aligned divisor: fall back to a single step (no ragged handling)


def _vmem_bytes_estimate(block_b, input_dim, latent_dim, hidden_dim,
                         weight_itemsize, weight_buffers):
    """Rough scoped-VMEM footprint (bytes) for one grid step."""
    w_elems = (input_dim * hidden_dim + hidden_dim * hidden_dim
               + hidden_dim * latent_dim + latent_dim * hidden_dim
               + hidden_dim * hidden_dim + hidden_dim * input_dim)
    b_elems = 4 * hidden_dim + latent_dim + input_dim
    bias_buffers = 1 if weight_buffers == 1 else 2
    resident = (weight_buffers * w_elems * weight_itemsize
                + bias_buffers * b_elems * 4
                + bias_buffers * 4 * hidden_dim * 4)          # emotion table
    streams = 2 * block_b * (input_dim * 4 + 4 + input_dim * 4)  # x, idx, out (2-deep)
    acts = 4 * block_b * max(hidden_dim, input_dim) * 4          # live f32 activations
    return resident + streams + acts


def prepare_params(params):
    """One-time cast of the f32 master params into kernel-ready dtypes.

    Weights -> bf16 (MXU native, halves resident VMEM / weight DMA), biases and the
    emotion table stay f32.  Call once; do NOT re-cast per forward call."""
    out = {k: params[k].astype(jnp.bfloat16)
           for k in ("we1", "we2", "wl1", "wl2", "wd1", "wd2")}
    out.update({k: params[k].astype(jnp.float32)
                for k in ("be1", "be2", "bl1", "bl2", "bd1", "bd2")})
    out["emotion_embedding"] = params["emotion_embedding"].astype(jnp.float32)
    return out


def harmonicflow_forward(x, params, emotion_idx=None, *, block_b=None,
                         dimension_semantics=("parallel",)):
    """Fused HarmonicFlow forward pass.

    x: (B, input_dim) float32 (or bf16)
    params: dict from prepare_params() (bf16 weights, f32 biases), weights stored (in, out)
    emotion_idx: optional (B,) int32 indices into the (4, hidden_dim) embedding
    block_b: batch tile (default: single grid step up to 512 rows, then 512/256/128)
    dimension_semantics: pass (pltpu.CORE_PARALLEL,) with >=2 grid steps on v7x to
        split the batch across both TensorCores.
    """
    B, input_dim = x.shape
    hidden_dim = params["we1"].shape[1]
    latent_dim = params["wl1"].shape[1]

    if block_b is None:
        block_b = _default_block_b(B)
    assert B % block_b == 0, "B must be a multiple of block_b (no ragged handling)"
    assert block_b == B or block_b % 16 == 0, \
        "block_b must be a multiple of 16 rows (bf16 sublane packing)"

    use_emotion = emotion_idx is not None

    def batch_spec(feat):
        return pl.BlockSpec((block_b, feat), lambda i: (i, 0))

    def full_spec(shape):
        # Grid-invariant block: single-buffer it when the API supports it
        # (halves resident-weight VMEM; zero perf cost since the block never changes).
        if _SINGLE_BUFFER is not None:
            return pl.BlockSpec(shape, lambda i: (0,) * len(shape),
                                pipeline_mode=_SINGLE_BUFFER)
        return pl.BlockSpec(shape, lambda i: (0,) * len(shape))

    in_specs = [
        batch_spec(input_dim),                                   # x
        full_spec(params["we1"].shape), full_spec(params["be1"].shape),
        full_spec(params["we2"].shape), full_spec(params["be2"].shape),
        full_spec(params["wl1"].shape), full_spec(params["bl1"].shape),
        full_spec(params["wl2"].shape), full_spec(params["bl2"].shape),
    ]
    args = [
        x,
        params["we1"], params["be1"], params["we2"], params["be2"],
        params["wl1"], params["bl1"], params["wl2"], params["bl2"],
    ]
    if use_emotion:
        idx2d = emotion_idx.astype(jnp.int32).reshape(B, 1)      # tiny per-row stream
        emo_table = params["emotion_embedding"]
        in_specs += [pl.BlockSpec((block_b, 1), lambda i: (i, 0)),
                     full_spec(emo_table.shape)]
        args += [idx2d, emo_table]
    in_specs += [
        full_spec(params["wd1"].shape), full_spec(params["bd1"].shape),
        full_spec(params["wd2"].shape), full_spec(params["bd2"].shape),
    ]
    args += [params["wd1"], params["bd1"], params["wd2"], params["bd2"]]

    out_spec = batch_spec(input_dim)
    grid = (B // block_b,)

    # Only set an explicit VMEM limit when the estimated footprint would exceed the
    # smallest default scoped limit (v5e: 16 MiB); at demo shapes this stays None.
    weight_buffers = 1 if _SINGLE_BUFFER is not None else 2
    est = _vmem_bytes_estimate(block_b, input_dim, latent_dim, hidden_dim,
                               params["we1"].dtype.itemsize, weight_buffers)
    vmem_limit = None
    if est > 12 * 1024 * 1024:
        vmem_limit = min(int(est * 1.5), 64 * 1024 * 1024)

    kernel = functools.partial(_harmonicflow_kernel, use_emotion=use_emotion)

    fn = pl.pallas_call(
        kernel,
        out_shape=jax.ShapeDtypeStruct((B, input_dim), jnp.float32),
        grid_spec=pltpu.PrefetchScalarGridSpec(
            num_scalar_prefetch=0,
            grid=grid,
            in_specs=in_specs,
            out_specs=out_spec,
        ),
        compiler_params=pltpu.CompilerParams(
            dimension_semantics=dimension_semantics,
            vmem_limit_bytes=vmem_limit,
        ),
    )
    return fn(*args)


def init_params(key, input_dim, latent_dim, hidden_dim):
    """Deterministic synthetic parameter init (weights stored as (in, out), f32 master)."""
    ks = jax.random.split(key, 16)

    def w(k, i, o):
        return (jax.random.normal(k, (i, o), dtype=jnp.float32)
                * (1.0 / jnp.sqrt(i))).astype(jnp.float32)

    def b(k, o):
        return jax.random.normal(k, (1, o), dtype=jnp.float32) * 0.01

    params = {
        # audio_encoder
        "we1": w(ks[0], input_dim, hidden_dim),  "be1": b(ks[1], hidden_dim),
        "we2": w(ks[2], hidden_dim, hidden_dim), "be2": b(ks[3], hidden_dim),
        # latent_space.encode (modeled)
        "wl1": w(ks[4], hidden_dim, latent_dim), "bl1": b(ks[5], latent_dim),
        "wl2": w(ks[6], latent_dim, hidden_dim), "bl2": b(ks[7], hidden_dim),
        # audio_decoder
        "wd1": w(ks[8], hidden_dim, hidden_dim), "bd1": b(ks[9], hidden_dim),
        "wd2": w(ks[10], hidden_dim, input_dim), "bd2": b(ks[11], input_dim),
        # emotion embedding table (4, hidden_dim)
        "emotion_embedding": jax.random.normal(
            ks[12], (4, hidden_dim), dtype=jnp.float32),
    }
    return params


def _reference_forward(x, params, emotion_idx=None):
    """Plain-JAX reference mirroring the kernel numerics (bf16 weights/acts, f32 accum)."""
    bf = jnp.bfloat16

    def lin(a, wname, bname):
        return (jnp.dot(a.astype(bf), params[wname].astype(bf),
                        preferred_element_type=jnp.float32)
                + params[bname].astype(jnp.float32))

    h = jnp.maximum(lin(x, "we1", "be1"), 0.0)
    h = jnp.maximum(lin(h, "we2", "be2"), 0.0)
    z = jnp.maximum(lin(h, "wl1", "bl1"), 0.0)
    z = lin(z, "wl2", "bl2")
    if emotion_idx is not None:
        z = z + params["emotion_embedding"].astype(jnp.float32)[emotion_idx]
    y = jnp.maximum(lin(z, "wd1", "bd1"), 0.0)
    y = lin(y, "wd2", "bd2")
    return y


if __name__ == "__main__":
    # Small shapes consistent with the module (scaled down from 512/256/512).
    # B=64 -> single grid step (block_b=64): full batch hits the MXU in one shot.
    B, INPUT_DIM, LATENT_DIM, HIDDEN_DIM = 64, 256, 128, 256

    key = jax.random.PRNGKey(0)
    k_x, k_e, k_p = jax.random.split(key, 3)

    x = jax.random.normal(k_x, (B, INPUT_DIM), dtype=jnp.float32)
    emotion_idx = jax.random.randint(k_e, (B,), 0, 4, dtype=jnp.int32)
    params_f32 = init_params(k_p, INPUT_DIM, LATENT_DIM, HIDDEN_DIM)
    params = prepare_params(params_f32)     # one-time bf16 weight cast (hoisted)

    # Path 1: with emotion embedding (in-kernel select-tree gather).
    out = jax.block_until_ready(harmonicflow_forward(x, params, emotion_idx))
    ref = _reference_forward(x, params_f32, emotion_idx)
    assert out.shape == (B, INPUT_DIM)
    assert jnp.allclose(out, ref, atol=1e-2, rtol=1e-2), float(jnp.max(jnp.abs(out - ref)))

    # Path 2: no emotion (specialized kernel variant, no emo inputs at all).
    out2 = jax.block_until_ready(harmonicflow_forward(x, params, None))
    ref2 = _reference_forward(x, params_f32, None)
    assert jnp.allclose(out2, ref2, atol=1e-2, rtol=1e-2), float(jnp.max(jnp.abs(out2 - ref2)))

    print("KERNEL_OK")
</pallas_src>

<mosaic_0001>
module attributes {stable_mosaic.version = 11 : i64} {
  func.func @_harmonicflow_kernel(%arg0: i32, %arg1: memref<64x256xf32, #tpu.memory_space<vmem>>, %arg2: memref<256x256xbf16, #tpu.memory_space<vmem>>, %arg3: memref<1x256xf32, #tpu.memory_space<vmem>>, %arg4: memref<256x256xbf16, #tpu.memory_space<vmem>>, %arg5: memref<1x256xf32, #tpu.memory_space<vmem>>, %arg6: memref<256x128xbf16, #tpu.memory_space<vmem>>, %arg7: memref<1x128xf32, #tpu.memory_space<vmem>>, %arg8: memref<128x256xbf16, #tpu.memory_space<vmem>>, %arg9: memref<1x256xf32, #tpu.memory_space<vmem>>, %arg10: memref<64x1xi32, #tpu.memory_space<vmem>>, %arg11: memref<4x256xf32, #tpu.memory_space<vmem>>, %arg12: memref<256x256xbf16, #tpu.memory_space<vmem>>, %arg13: memref<1x256xf32, #tpu.memory_space<vmem>>, %arg14: memref<256x256xbf16, #tpu.memory_space<vmem>>, %arg15: memref<1x256xf32, #tpu.memory_space<vmem>>, %arg16: memref<64x256xf32, #tpu.memory_space<vmem>>) attributes {dimension_semantics = [#tpu.dimension_semantics<parallel>], iteration_bounds = array<i64: 1>, scalar_prefetch = 0 : i64, scratch_operands = 0 : i64, tpu.core_type = #tpu.core_type<tc>, window_params = [{transform_indices = @transform_0, window_bounds = array<i64: 64, 256>}, {pipeline_mode = #tpu.pipeline_mode<synchronous>, transform_indices = @transform_1, window_bounds = array<i64: 256, 256>}, {pipeline_mode = #tpu.pipeline_mode<synchronous>, transform_indices = @transform_2, window_bounds = array<i64: 1, 256>}, {pipeline_mode = #tpu.pipeline_mode<synchronous>, transform_indices = @transform_3, window_bounds = array<i64: 256, 256>}, {pipeline_mode = #tpu.pipeline_mode<synchronous>, transform_indices = @transform_4, window_bounds = array<i64: 1, 256>}, {pipeline_mode = #tpu.pipeline_mode<synchronous>, transform_indices = @transform_5, window_bounds = array<i64: 256, 128>}, {pipeline_mode = #tpu.pipeline_mode<synchronous>, transform_indices = @transform_6, window_bounds = array<i64: 1, 128>}, {pipeline_mode = #tpu.pipeline_mode<synchronous>, transform_indices = @transform_7, window_bounds = array<i64: 128, 256>}, {pipeline_mode = #tpu.pipeline_mode<synchronous>, transform_indices = @transform_8, window_bounds = array<i64: 1, 256>}, {transform_indices = @transform_9, window_bounds = array<i64: 64, 1>}, {pipeline_mode = #tpu.pipeline_mode<synchronous>, transform_indices = @transform_10, window_bounds = array<i64: 4, 256>}, {pipeline_mode = #tpu.pipeline_mode<synchronous>, transform_indices = @transform_11, window_bounds = array<i64: 256, 256>}, {pipeline_mode = #tpu.pipeline_mode<synchronous>, transform_indices = @transform_12, window_bounds = array<i64: 1, 256>}, {pipeline_mode = #tpu.pipeline_mode<synchronous>, transform_indices = @transform_13, window_bounds = array<i64: 256, 256>}, {pipeline_mode = #tpu.pipeline_mode<synchronous>, transform_indices = @transform_14, window_bounds = array<i64: 1, 256>}, {transform_indices = @transform_15, window_bounds = array<i64: 64, 256>}]} {
    %c0 = arith.constant 0 : index
    %c0_0 = arith.constant 0 : index
    %0 = vector.load %arg1[%c0, %c0_0] : memref<64x256xf32, #tpu.memory_space<vmem>>, vector<64x256xf32>
    %1 = arith.truncf %0 : vector<64x256xf32> to vector<64x256xbf16>
    %c0_1 = arith.constant 0 : index
    %c0_2 = arith.constant 0 : index
    %2 = vector.load %arg2[%c0_1, %c0_2] : memref<256x256xbf16, #tpu.memory_space<vmem>>, vector<256x256xbf16>
    %cst = arith.constant dense<0.000000e+00> : vector<64x256xf32>
    %3 = tpu.matmul %1, %2, %cst {dimension_numbers = #tpu.dot_dimension_numbers<[1], [0], [0], [1], [0, 0, 1, 1], [], []>} : vector<64x256xbf16>, vector<256x256xbf16>, vector<64x256xf32> -> vector<64x256xf32>
    %c0_3 = arith.constant 0 : index
    %c0_4 = arith.constant 0 : index
    %4 = vector.load %arg3[%c0_3, %c0_4] : memref<1x256xf32, #tpu.memory_space<vmem>>, vector<1x256xf32>
    %5 = vector.broadcast %4 : vector<1x256xf32> to vector<64x256xf32>
    %6 = arith.addf %3, %5 : vector<64x256xf32>
    %cst_5 = arith.constant 0.000000e+00 : f32
    %7 = vector.broadcast %cst_5 : f32 to vector<64x256xf32>
    %8 = arith.maximumf %6, %7 : vector<64x256xf32>
    %9 = arith.truncf %8 : vector<64x256xf32> to vector<64x256xbf16>
    %c0_6 = arith.constant 0 : index
    %c0_7 = arith.constant 0 : index
    %10 = vector.load %arg4[%c0_6, %c0_7] : memref<256x256xbf16, #tpu.memory_space<vmem>>, vector<256x256xbf16>
    %cst_8 = arith.constant dense<0.000000e+00> : vector<64x256xf32>
    %11 = tpu.matmul %9, %10, %cst_8 {dimension_numbers = #tpu.dot_dimension_numbers<[1], [0], [0], [1], [0, 0, 1, 1], [], []>} : vector<64x256xbf16>, vector<256x256xbf16>, vector<64x256xf32> -> vector<64x256xf32>
    %c0_9 = arith.constant 0 : index
    %c0_10 = arith.constant 0 : index
    %12 = vector.load %arg5[%c0_9, %c0_10] : memref<1x256xf32, #tpu.memory_space<vmem>>, vector<1x256xf32>
    %13 = vector.broadcast %12 : vector<1x256xf32> to vector<64x256xf32>
    %14 = arith.addf %11, %13 : vector<64x256xf32>
    %cst_11 = arith.constant 0.000000e+00 : f32
    %15 = vector.broadcast %cst_11 : f32 to vector<64x256xf32>
    %16 = arith.maximumf %14, %15 : vector<64x256xf32>
    %17 = arith.truncf %16 : vector<64x256xf32> to vector<64x256xbf16>
    %c0_12 = arith.constant 0 : index
    %c0_13 = arith.constant 0 : index
    %18 = vector.load %arg6[%c0_12, %c0_13] : memref<256x128xbf16, #tpu.memory_space<vmem>>, vector<256x128xbf16>
    %cst_14 = arith.constant dense<0.000000e+00> : vector<64x128xf32>
    %19 = tpu.matmul %17, %18, %cst_14 {dimension_numbers = #tpu.dot_dimension_numbers<[1], [0], [0], [1], [0, 0, 1, 1], [], []>} : vector<64x256xbf16>, vector<256x128xbf16>, vector<64x128xf32> -> vector<64x128xf32>
    %c0_15 = arith.constant 0 : index
    %c0_16 = arith.constant 0 : index
    %20 = vector.load %arg7[%c0_15, %c0_16] : memref<1x128xf32, #tpu.memory_space<vmem>>, vector<1x128xf32>
    %21 = vector.broadcast %20 : vector<1x128xf32> to vector<64x128xf32>
    %22 = arith.addf %19, %21 : vector<64x128xf32>
    %cst_17 = arith.constant 0.000000e+00 : f32
    %23 = vector.broadcast %cst_17 : f32 to vector<64x128xf32>
    %24 = arith.maximumf %22, %23 : vector<64x128xf32>
    %25 = arith.truncf %24 : vector<64x128xf32> to vector<64x128xbf16>
    %c0_18 = arith.constant 0 : index
    %c0_19 = arith.constant 0 : index
    %26 = vector.load %arg8[%c0_18, %c0_19] : memref<128x256xbf16, #tpu.memory_space<vmem>>, vector<128x256xbf16>
    %cst_20 = arith.constant dense<0.000000e+00> : vector<64x256xf32>
    %27 = tpu.matmul %25, %26, %cst_20 {dimension_numbers = #tpu.dot_dimension_numbers<[1], [0], [0], [1], [0, 0, 1, 1], [], []>} : vector<64x128xbf16>, vector<128x256xbf16>, vector<64x256xf32> -> vector<64x256xf32>
    %c0_21 = arith.constant 0 : index
    %c0_22 = arith.constant 0 : index
    %28 = vector.load %arg9[%c0_21, %c0_22] : memref<1x256xf32, #tpu.memory_space<vmem>>, vector<1x256xf32>
    %29 = vector.broadcast %28 : vector<1x256xf32> to vector<64x256xf32>
    %30 = arith.addf %27, %29 : vector<64x256xf32>
    %c0_23 = arith.constant 0 : index
    %c0_24 = arith.constant 0 : index
    %31 = vector.load %arg10[%c0_23, %c0_24] : memref<64x1xi32, #tpu.memory_space<vmem>>, vector<64x1xi32>
    %c0_25 = arith.constant 0 : index
    %c0_26 = arith.constant 0 : index
    %32 = vector.load %arg11[%c0_25, %c0_26] : memref<4x256xf32, #tpu.memory_space<vmem>>, vector<4x256xf32>
    %c1_i32 = arith.constant 1 : i32
    %33 = vector.broadcast %c1_i32 : i32 to vector<64x1xi32>
    %34 = arith.cmpi eq, %31, %33 : vector<64x1xi32>
    %35 = vector.extract_strided_slice %32 {offsets = [1, 0], sizes = [1, 256], strides = [1, 1]} : vector<4x256xf32> to vector<1x256xf32>
    %36 = vector.extract_strided_slice %32 {offsets = [0, 0], sizes = [1, 256], strides = [1, 1]} : vector<4x256xf32> to vector<1x256xf32>
    %37 = vector.shape_cast %34 : vector<64x1xi1> to vector<64x1xi1>
    %38 = vector.broadcast %37 : vector<64x1xi1> to vector<64x256xi1>
    %39 = vector.shape_cast %35 : vector<1x256xf32> to vector<1x256xf32>
    %40 = vector.broadcast %39 : vector<1x256xf32> to vector<64x256xf32>
    %41 = vector.shape_cast %36 : vector<1x256xf32> to vector<1x256xf32>
    %42 = vector.broadcast %41 : vector<1x256xf32> to vector<64x256xf32>
    %43 = arith.select %38, %40, %42 : vector<64x256xi1>, vector<64x256xf32>
    %c3_i32 = arith.constant 3 : i32
    %44 = vector.broadcast %c3_i32 : i32 to vector<64x1xi32>
    %45 = arith.cmpi eq, %31, %44 : vector<64x1xi32>
    %46 = vector.extract_strided_slice %32 {offsets = [3, 0], sizes = [1, 256], strides = [1, 1]} : vector<4x256xf32> to vector<1x256xf32>
    %47 = vector.extract_strided_slice %32 {offsets = [2, 0], sizes = [1, 256], strides = [1, 1]} : vector<4x256xf32> to vector<1x256xf32>
    %48 = vector.shape_cast %45 : vector<64x1xi1> to vector<64x1xi1>
    %49 = vector.broadcast %48 : vector<64x1xi1> to vector<64x256xi1>
    %50 = vector.shape_cast %46 : vector<1x256xf32> to vector<1x256xf32>
    %51 = vector.broadcast %50 : vector<1x256xf32> to vector<64x256xf32>
    %52 = vector.shape_cast %47 : vector<1x256xf32> to vector<1x256xf32>
    %53 = vector.broadcast %52 : vector<1x256xf32> to vector<64x256xf32>
    %54 = arith.select %49, %51, %53 : vector<64x256xi1>, vector<64x256xf32>
    %c2_i32 = arith.constant 2 : i32
    %55 = vector.broadcast %c2_i32 : i32 to vector<64x1xi32>
    %56 = arith.cmpi sge, %31, %55 : vector<64x1xi32>
    %57 = vector.shape_cast %56 : vector<64x1xi1> to vector<64x1xi1>
    %58 = vector.broadcast %57 : vector<64x1xi1> to vector<64x256xi1>
    %59 = arith.select %58, %54, %43 : vector<64x256xi1>, vector<64x256xf32>
    %60 = arith.addf %30, %59 : vector<64x256xf32>
    %61 = arith.truncf %60 : vector<64x256xf32> to vector<64x256xbf16>
    %c0_27 = arith.constant 0 : index
    %c0_28 = arith.constant 0 : index
    %62 = vector.load %arg12[%c0_27, %c0_28] : memref<256x256xbf16, #tpu.memory_space<vmem>>, vector<256x256xbf16>
    %cst_29 = arith.constant dense<0.000000e+00> : vector<64x256xf32>
    %63 = tpu.matmul %61, %62, %cst_29 {dimension_numbers = #tpu.dot_dimension_numbers<[1], [0], [0], [1], [0, 0, 1, 1], [], []>} : vector<64x256xbf16>, vector<256x256xbf16>, vector<64x256xf32> -> vector<64x256xf32>
    %c0_30 = arith.constant 0 : index
    %c0_31 = arith.constant 0 : index
    %64 = vector.load %arg13[%c0_30, %c0_31] : memref<1x256xf32, #tpu.memory_space<vmem>>, vector<1x256xf32>
    %65 = vector.broadcast %64 : vector<1x256xf32> to vector<64x256xf32>
    %66 = arith.addf %63, %65 : vector<64x256xf32>
    %cst_32 = arith.constant 0.000000e+00 : f32
    %67 = vector.broadcast %cst_32 : f32 to vector<64x256xf32>
    %68 = arith.maximumf %66, %67 : vector<64x256xf32>
    %69 = arith.truncf %68 : vector<64x256xf32> to vector<64x256xbf16>
    %c0_33 = arith.constant 0 : index
    %c0_34 = arith.constant 0 : index
    %70 = vector.load %arg14[%c0_33, %c0_34] : memref<256x256xbf16, #tpu.memory_space<vmem>>, vector<256x256xbf16>
    %cst_35 = arith.constant dense<0.000000e+00> : vector<64x256xf32>
    %71 = tpu.matmul %69, %70, %cst_35 {dimension_numbers = #tpu.dot_dimension_numbers<[1], [0], [0], [1], [0, 0, 1, 1], [], []>} : vector<64x256xbf16>, vector<256x256xbf16>, vector<64x256xf32> -> vector<64x256xf32>
    %c0_36 = arith.constant 0 : index
    %c0_37 = arith.constant 0 : index
    %72 = vector.load %arg15[%c0_36, %c0_37] : memref<1x256xf32, #tpu.memory_space<vmem>>, vector<1x256xf32>
    %73 = vector.broadcast %72 : vector<1x256xf32> to vector<64x256xf32>
    %74 = arith.addf %71, %73 : vector<64x256xf32>
    %c0_38 = arith.constant 0 : index
    %c0_39 = arith.constant 0 : index
    %75 = vector.load %arg16[%c0_38, %c0_39] : memref<64x256xf32, #tpu.memory_space<vmem>>, vector<64x256xf32>
    tpu.vector_store %arg16[%c0_38, %c0_39], %74 {strides = array<i32>} : memref<64x256xf32, #tpu.memory_space<vmem>>, vector<64x256xf32>,
    return
  }
  func.func @transform_0(%arg0: i32) -> (i32, i32) {
    %c0_i32 = arith.constant 0 : i32
    %c0_i32_0 = arith.constant 0 : i32
    return %arg0, %c0_i32 : i32, i32
  }
  func.func @transform_1(%arg0: i32) -> (i32, i32) {
    %c0_i32 = arith.constant 0 : i32
    %c0_i32_0 = arith.constant 0 : i32
    %c0_i32_1 = arith.constant 0 : i32
    return %c0_i32, %c0_i32_0 : i32, i32
  }
  func.func @transform_2(%arg0: i32) -> (i32, i32) {
    %c0_i32 = arith.constant 0 : i32
    %c0_i32_0 = arith.constant 0 : i32
    %c0_i32_1 = arith.constant 0 : i32
    return %c0_i32, %c0_i32_0 : i32, i32
  }
  func.func @transform_3(%arg0: i32) -> (i32, i32) {
    %c0_i32 = arith.constant 0 : i32
    %c0_i32_0 = arith.constant 0 : i32
    %c0_i32_1 = arith.constant 0 : i32
    return %c0_i32, %c0_i32_0 : i32, i32
  }
  func.func @transform_4(%arg0: i32) -> (i32, i32) {
    %c0_i32 = arith.constant 0 : i32
    %c0_i32_0 = arith.constant 0 : i32
    %c0_i32_1 = arith.constant 0 : i32
    return %c0_i32, %c0_i32_0 : i32, i32
  }
  func.func @transform_5(%arg0: i32) -> (i32, i32) {
    %c0_i32 = arith.constant 0 : i32
    %c0_i32_0 = arith.constant 0 : i32
    %c0_i32_1 = arith.constant 0 : i32
    return %c0_i32, %c0_i32_0 : i32, i32
  }
  func.func @transform_6(%arg0: i32) -> (i32, i32) {
    %c0_i32 = arith.constant 0 : i32
    %c0_i32_0 = arith.constant 0 : i32
    %c0_i32_1 = arith.constant 0 : i32
    return %c0_i32, %c0_i32_0 : i32, i32
  }
  func.func @transform_7(%arg0: i32) -> (i32, i32) {
    %c0_i32 = arith.constant 0 : i32
    %c0_i32_0 = arith.constant 0 : i32
    %c0_i32_1 = arith.constant 0 : i32
    return %c0_i32, %c0_i32_0 : i32, i32
  }
  func.func @transform_8(%arg0: i32) -> (i32, i32) {
    %c0_i32 = arith.constant 0 : i32
    %c0_i32_0 = arith.constant 0 : i32
    %c0_i32_1 = arith.constant 0 : i32
    return %c0_i32, %c0_i32_0 : i32, i32
  }
  func.func @transform_9(%arg0: i32) -> (i32, i32) {
    %c0_i32 = arith.constant 0 : i32
    %c0_i32_0 = arith.constant 0 : i32
    return %arg0, %c0_i32 : i32, i32
  }
  func.func @transform_10(%arg0: i32) -> (i32, i32) {
    %c0_i32 = arith.constant 0 : i32
    %c0_i32_0 = arith.constant 0 : i32
    %c0_i32_1 = arith.constant 0 : i32
    return %c0_i32, %c0_i32_0 : i32, i32
  }
  func.func @transform_11(%arg0: i32) -> (i32, i32) {
    %c0_i32 = arith.constant 0 : i32
    %c0_i32_0 = arith.constant 0 : i32
    %c0_i32_1 = arith.constant 0 : i32
    return %c0_i32, %c0_i32_0 : i32, i32
  }
  func.func @transform_12(%arg0: i32) -> (i32, i32) {
    %c0_i32 = arith.constant 0 : i32
    %c0_i32_0 = arith.constant 0 : i32
    %c0_i32_1 = arith.constant 0 : i32
    return %c0_i32, %c0_i32_0 : i32, i32
  }
  func.func @transform_13(%arg0: i32) -> (i32, i32) {
    %c0_i32 = arith.constant 0 : i32
    %c0_i32_0 = arith.constant 0 : i32
    %c0_i32_1 = arith.constant 0 : i32
    return %c0_i32, %c0_i32_0 : i32, i32
  }
  func.func @transform_14(%arg0: i32) -> (i32, i32) {
    %c0_i32 = arith.constant 0 : i32
    %c0_i32_0 = arith.constant 0 : i32
    %c0_i32_1 = arith.constant 0 : i32
    return %c0_i32, %c0_i32_0 : i32, i32
  }
  func.func @transform_15(%arg0: i32) -> (i32, i32) {
    %c0_i32 = arith.constant 0 : i32
    %c0_i32_0 = arith.constant 0 : i32
    return %arg0, %c0_i32 : i32, i32
  }
}

</mosaic_0001>

<llo_original>
// kernel: tpu_custom_call.1
$region0: #{tpu_custom_call.1}
  #allocation0 [shape = 'u32[]', space=smem, size = 0x4, offset = 0x4, fixed_abs, tag = 'smem constant byte address 0x4 - core index']
  #allocation1 [shape = 'u32[144,128]{1,0:T(1,128)}', space=vmem, size = 0x12000, scoped, tag = 'internal scratch']
  %s0 = inlined_call_operand.hbm [shape: f32[64,256], index: 0, kind: input, shape index: {}]
  %s1 = inlined_call_operand.hbm [shape: bf16[256,256], index: 1, kind: input, shape index: {}]
  %s2 = inlined_call_operand.vmem [shape: f32[1,256], index: 2, kind: input, shape index: {}]
  %s3 = inlined_call_operand.hbm [shape: bf16[256,256], index: 3, kind: input, shape index: {}]
  %s4 = inlined_call_operand.vmem [shape: f32[1,256], index: 4, kind: input, shape index: {}]
  %s5 = inlined_call_operand.hbm [shape: bf16[256,128], index: 5, kind: input, shape index: {}]
  %s6 = inlined_call_operand.vmem [shape: f32[1,128], index: 6, kind: input, shape index: {}]
  %s7 = inlined_call_operand.hbm [shape: bf16[128,256], index: 7, kind: input, shape index: {}]
  %s8 = inlined_call_operand.vmem [shape: f32[1,256], index: 8, kind: input, shape index: {}]
  %s9 = inlined_call_operand.vmem [shape: s32[64,1], index: 9, kind: input, shape index: {}]
  %s10 = inlined_call_operand.vmem [shape: f32[4,256], index: 10, kind: input, shape index: {}]
  %s11 = inlined_call_operand.hbm [shape: bf16[256,256], index: 11, kind: input, shape index: {}]
  %s12 = inlined_call_operand.vmem [shape: f32[1,256], index: 12, kind: input, shape index: {}]
  %s13 = inlined_call_operand.hbm [shape: bf16[256,256], index: 13, kind: input, shape index: {}]
  %s14 = inlined_call_operand.vmem [shape: f32[1,256], index: 14, kind: input, shape index: {}]
  %s15 = inlined_call_operand.hbm [shape: f32[64,256], index: 15, kind: output, shape index: {}]
  %s16 = sld [smem:[#allocation0]]
  $region98: #{tpu_custom_call.1} parent=0
    _
  %s18 = ssub.s32 1, %s16
  %s19 = scalar_select 0, %s18, %s16
  $region1: #{tpu_custom_call.1} parent=0
    #allocation2 [shape = 'u8[65536]{0}', space=vmem, size = 0x10000, scoped, tag = 'input window, operand 0, single buffered']
    #allocation3 [shape = 's32[1]{0}', space=sflag, size = 0x4, scoped, tag = 'scoped memory for tpu_custom_call.1']
    #allocation4 [shape = 's32[1]{0}', space=sflag, size = 0x4, scoped, tag = 'scoped memory for tpu_custom_call.1']
    #allocation5 [shape = 'u8[131072]{0}', space=vmem, size = 0x20000, scoped, tag = 'input window, operand 1, single buffered']
    #allocation6 [shape = 's32[1]{0}', space=sflag, size = 0x4, scoped, tag = 'scoped memory for tpu_custom_call.1']
    #allocation7 [shape = 'u8[131072]{0}', space=vmem, size = 0x20000, scoped, tag = 'input window, operand 3, single buffered']
    #allocation8 [shape = 'u8[65536]{0}', space=vmem, size = 0x10000, scoped, tag = 'input window, operand 5, single buffered']
    #allocation9 [shape = 's32[1]{0}', space=sflag, size = 0x4, scoped, tag = 'scoped memory for tpu_custom_call.1']
    #allocation10 [shape = 'u8[65536]{0}', space=vmem, size = 0x10000, scoped, tag = 'input window, operand 7, single buffered']
    #allocation11 [shape = 'u8[131072]{0}', space=vmem, size = 0x20000, scoped, tag = 'input window, operand 11, single buffered']
    #allocation12 [shape = 's32[1]{0}', space=sflag, size = 0x4, scoped, tag = 'scoped memory for tpu_custom_call.1']
    #allocation13 [shape = 'u8[131072]{0}', space=vmem, size = 0x20000, scoped, tag = 'input window, operand 13, single buffered']
    #allocation14 [shape = 'u8[65536]{0}', space=vmem, size = 0x10000, scoped, tag = 'output window, operand 0, single buffered']
    %20 = vsyncpa [#allocation3], 0
    %21 = vsyncpa [#allocation6], 0
    %22 = vsyncpa [#allocation9], 0
    %23 = vsyncpa [#allocation12], 0
    %24 = vsyncpa [#allocation4], 0
    // Predicated region
    $region2: #{tpu_custom_call.1} parent=1 // pred_check
      _
    $region3: #{tpu_custom_call.1} parent=1 // pred_check_branch
      %26 = sbr.rel (0) target = $region5
    $region4: #{tpu_custom_call.1} parent=1 // pred_region
      %s28 = ssub.s32 2048, 2048
      %29 = vsyncadd [#allocation3], %s28
      %s30 = sshll.u32 [#allocation2], 4
      %s31 = int_to_ptr.vmem [resolvable:$true] %s30
      %36 = dma.hbm_to_vmem [thread:$0]  %s0, 2048, %s31, [#allocation3], 256, 256, 16
    $region5: #{tpu_custom_call.1} parent=1 // pred_fallthru
      _
    // Predicated region
    $region6: #{tpu_custom_call.1} parent=1 // pred_check
      _
    $region7: #{tpu_custom_call.1} parent=1 // pred_check_branch
      %38 = sbr.rel (0) target = $region9
    $region8: #{tpu_custom_call.1} parent=1 // pred_region
      %s40 = ssub.s32 4096, 4096
      %41 = vsyncadd [#allocation6], %s40
      %s42 = sshll.u32 [#allocation5], 4
      %s43 = int_to_ptr.vmem [resolvable:$true] %s42
      %48 = dma.hbm_to_vmem [thread:$0]  %s1, 4096, %s43, [#allocation6], 128, 128, 8
    $region9: #{tpu_custom_call.1} parent=1 // pred_fallthru
      _
    // Predicated region
    $region10: #{tpu_custom_call.1} parent=1 // pred_check
      _
    $region11: #{tpu_custom_call.1} parent=1 // pred_check_branch
      %50 = sbr.rel (0) target = $region13
    $region12: #{tpu_custom_call.1} parent=1 // pred_region
      _
    $region13: #{tpu_custom_call.1} parent=1 // pred_fallthru
      _
    // Predicated region
    $region14: #{tpu_custom_call.1} parent=1 // pred_check
      _
    $region15: #{tpu_custom_call.1} parent=1 // pred_check_branch
      %52 = sbr.rel (0) target = $region17
    $region16: #{tpu_custom_call.1} parent=1 // pred_region
      %s54 = ssub.s32 4096, 4096
      %55 = vsyncadd [#allocation6], %s54
      %s56 = sshll.u32 [#allocation7], 4
      %s57 = int_to_ptr.vmem [resolvable:$true] %s56
      %62 = dma.hbm_to_vmem [thread:$0]  %s3, 4096, %s57, [#allocation6], 128, 128, 8
    $region17: #{tpu_custom_call.1} parent=1 // pred_fallthru
      _
    // Predicated region
    $region18: #{tpu_custom_call.1} parent=1 // pred_check
      _
    $region19: #{tpu_custom_call.1} parent=1 // pred_check_branch
      %64 = sbr.rel (0) target = $region21
    $region20: #{tpu_custom_call.1} parent=1 // pred_region
      _
    $region21: #{tpu_custom_call.1} parent=1 // pred_fallthru
      _
    // Predicated region
    $region22: #{tpu_custom_call.1} parent=1 // pred_check
      _
    $region23: #{tpu_custom_call.1} parent=1 // pred_check_branch
      %66 = sbr.rel (0) target = $region25
    $region24: #{tpu_custom_call.1} parent=1 // pred_region
      %s68 = ssub.s32 2048, 2048
      %69 = vsyncadd [#allocation9], %s68
      %s70 = sshll.u32 [#allocation8], 4
      %s71 = int_to_ptr.vmem [resolvable:$true] %s70
      %76 = dma.hbm_to_vmem [thread:$0]  %s5, 2048, %s71, [#allocation9], 64, 64, 4
    $region25: #{tpu_custom_call.1} parent=1 // pred_fallthru
      _
    // Predicated region
    $region26: #{tpu_custom_call.1} parent=1 // pred_check
      _
    $region27: #{tpu_custom_call.1} parent=1 // pred_check_branch
      %78 = sbr.rel (0) target = $region29
    $region28: #{tpu_custom_call.1} parent=1 // pred_region
      _
    $region29: #{tpu_custom_call.1} parent=1 // pred_fallthru
      _
    // Predicated region
    $region30: #{tpu_custom_call.1} parent=1 // pred_check
      _
    $region31: #{tpu_custom_call.1} parent=1 // pred_check_branch
      %80 = sbr.rel (0) target = $region33
    $region32: #{tpu_custom_call.1} parent=1 // pred_region
      %s82 = ssub.s32 2048, 2048
      %83 = vsyncadd [#allocation9], %s82
      %s84 = sshll.u32 [#allocation10], 4
      %s85 = int_to_ptr.vmem [resolvable:$true] %s84
      %90 = dma.hbm_to_vmem [thread:$0]  %s7, 2048, %s85, [#allocation9], 128, 128, 8
    $region33: #{tpu_custom_call.1} parent=1 // pred_fallthru
      _
    // Predicated region
    $region34: #{tpu_custom_call.1} parent=1 // pred_check
      _
    $region35: #{tpu_custom_call.1} parent=1 // pred_check_branch
      %92 = sbr.rel (0) target = $region37
    $region36: #{tpu_custom_call.1} parent=1 // pred_region
      _
    $region37: #{tpu_custom_call.1} parent=1 // pred_fallthru
      _
    // Predicated region
    $region38: #{tpu_custom_call.1} parent=1 // pred_check
      _
    $region39: #{tpu_custom_call.1} parent=1 // pred_check_branch
      %94 = sbr.rel (0) target = $region41
    $region40: #{tpu_custom_call.1} parent=1 // pred_region
      _
    $region41: #{tpu_custom_call.1} parent=1 // pred_fallthru
      _
    // Predicated region
    $region42: #{tpu_custom_call.1} parent=1 // pred_check
      _
    $region43: #{tpu_custom_call.1} parent=1 // pred_check_branch
      %96 = sbr.rel (0) target = $region45
    $region44: #{tpu_custom_call.1} parent=1 // pred_region
      _
    $region45: #{tpu_custom_call.1} parent=1 // pred_fallthru
      _
    // Predicated region
    $region46: #{tpu_custom_call.1} parent=1 // pred_check
      _
    $region47: #{tpu_custom_call.1} parent=1 // pred_check_branch
      %98 = sbr.rel (0) target = $region49
    $region48: #{tpu_custom_call.1} parent=1 // pred_region
      %s100 = ssub.s32 4096, 4096
      %101 = vsyncadd [#allocation12], %s100
      %s102 = sshll.u32 [#allocation11], 4
      %s103 = int_to_ptr.vmem [resolvable:$true] %s102
      %108 = dma.hbm_to_vmem [thread:$0]  %s11, 4096, %s103, [#allocation12], 128, 128, 8
    $region49: #{tpu_custom_call.1} parent=1 // pred_fallthru
      _
    // Predicated region
    $region50: #{tpu_custom_call.1} parent=1 // pred_check
      _
    $region51: #{tpu_custom_call.1} parent=1 // pred_check_branch
      %110 = sbr.rel (0) target = $region53
    $region52: #{tpu_custom_call.1} parent=1 // pred_region
      _
    $region53: #{tpu_custom_call.1} parent=1 // pred_fallthru
      _
    // Predicated region
    $region54: #{tpu_custom_call.1} parent=1 // pred_check
      _
    $region55: #{tpu_custom_call.1} parent=1 // pred_check_branch
      %112 = sbr.rel (0) target = $region57
    $region56: #{tpu_custom_call.1} parent=1 // pred_region
      %s114 = ssub.s32 4096, 4096
      %115 = vsyncadd [#allocation12], %s114
      %s116 = sshll.u32 [#allocation13], 4
      %s117 = int_to_ptr.vmem [resolvable:$true] %s116
      %122 = dma.hbm_to_vmem [thread:$0]  %s13, 4096, %s117, [#allocation12], 128, 128, 8
    $region57: #{tpu_custom_call.1} parent=1 // pred_fallthru
      _
    // Predicated region
    $region58: #{tpu_custom_call.1} parent=1 // pred_check
      _
    $region59: #{tpu_custom_call.1} parent=1 // pred_check_branch
      %124 = sbr.rel (0) target = $region61
    $region60: #{tpu_custom_call.1} parent=1 // pred_region
      _
    $region61: #{tpu_custom_call.1} parent=1 // pred_fallthru
      _
    // Predicated region
    $region62: #{tpu_custom_call.1} parent=1 // pred_check
      _
    $region63: #{tpu_custom_call.1} parent=1 // pred_check_branch
      %126 = sbr.rel (0) target = $region65
    $region64: #{tpu_custom_call.1} parent=1 // pred_region
      %127 = dma.done [#allocation3], 2048
    $region65: #{tpu_custom_call.1} parent=1 // pred_fallthru
      _
    // Predicated region
    $region66: #{tpu_custom_call.1} parent=1 // pred_check
      _
    $region67: #{tpu_custom_call.1} parent=1 // pred_check_branch
      %129 = sbr.rel (0) target = $region69
    $region68: #{tpu_custom_call.1} parent=1 // pred_region
      %130 = dma.done [#allocation6], 4096
    $region69: #{tpu_custom_call.1} parent=1 // pred_fallthru
      _
    // Predicated region
    $region70: #{tpu_custom_call.1} parent=1 // pred_check
      _
    $region71: #{tpu_custom_call.1} parent=1 // pred_check_branch
      %132 = sbr.rel (0) target = $region73
    $region72: #{tpu_custom_call.1} parent=1 // pred_region
      %133 = dma.done [#allocation6], 4096
    $region73: #{tpu_custom_call.1} parent=1 // pred_fallthru
      _
    // Predicated region
    $region74: #{tpu_custom_call.1} parent=1 // pred_check
      _
    $region75: #{tpu_custom_call.1} parent=1 // pred_check_branch
      %135 = sbr.rel (0) target = $region77
    $region76: #{tpu_custom_call.1} parent=1 // pred_region
      %136 = dma.done [#allocation9], 2048
    $region77: #{tpu_custom_call.1} parent=1 // pred_fallthru
      _
    // Predicated region
    $region78: #{tpu_custom_call.1} parent=1 // pred_check
      _
    $region79: #{tpu_custom_call.1} parent=1 // pred_check_branch
      %138 = sbr.rel (0) target = $region81
    $region80: #{tpu_custom_call.1} parent=1 // pred_region
      %139 = dma.done [#allocation9], 2048
    $region81: #{tpu_custom_call.1} parent=1 // pred_fallthru
      _
    // Predicated region
    $region82: #{tpu_custom_call.1} parent=1 // pred_check
      _
    $region83: #{tpu_custom_call.1} parent=1 // pred_check_branch
      %141 = sbr.rel (0) target = $region85
    $region84: #{tpu_custom_call.1} parent=1 // pred_region
      %142 = dma.done [#allocation12], 4096
    $region85: #{tpu_custom_call.1} parent=1 // pred_fallthru
      _
    // Predicated region
    $region86: #{tpu_custom_call.1} parent=1 // pred_check
      _
    $region87: #{tpu_custom_call.1} parent=1 // pred_check_branch
      %144 = sbr.rel (0) target = $region89
    $region88: #{tpu_custom_call.1} parent=1 // pred_region
      %145 = dma.done [#allocation12], 4096
    $region89: #{tpu_custom_call.1} parent=1 // pred_fallthru
      _
    %v147 = vld [vmem:[#allocation2] sm:$0xff]
    %v148 = vld [vmem:[#allocation2 + $0x8] sm:$0xff]
    %v149 = vld [vmem:[#allocation2 + $0x10] sm:$0xff]
    %v150 = vld [vmem:[#allocation2 + $0x18] sm:$0xff]
    %v151 = vld [vmem:[#allocation2 + $0x20] sm:$0xff]
    %v152 = vld [vmem:[#allocation2 + $0x28] sm:$0xff]
    %v153 = vld [vmem:[#allocation2 + $0x30] sm:$0xff]
    %v154 = vld [vmem:[#allocation2 + $0x38] sm:$0xff]
    %v155 = vld [vmem:[#allocation2 + $0x40] sm:$0xff]
    %v156 = vld [vmem:[#allocation2 + $0x48] sm:$0xff]
    %v157 = vld [vmem:[#allocation2 + $0x50] sm:$0xff]
    %v158 = vld [vmem:[#allocation2 + $0x58] sm:$0xff]
    %v159 = vld [vmem:[#allocation2 + $0x60] sm:$0xff]
    %v160 = vld [vmem:[#allocation2 + $0x68] sm:$0xff]
    %v161 = vld [vmem:[#allocation2 + $0x70] sm:$0xff]
    %v162 = vld [vmem:[#allocation2 + $0x78] sm:$0xff]
    %v163 = vpack.c.bf16 %v149, %v147
    %v164 = vpack.c.bf16 %v150, %v148
    %v165 = vpack.c.bf16 %v153, %v151
    %v166 = vpack.c.bf16 %v154, %v152
    %v167 = vpack.c.bf16 %v157, %v155
    %v168 = vpack.c.bf16 %v158, %v156
    %v169 = vpack.c.bf16 %v161, %v159
    %v170 = vpack.c.bf16 %v162, %v160
    %v171 = vld [vmem:[#allocation5] sm:$0xff]
    %v172 = vld [vmem:[#allocation5 + $0x8] sm:$0xff]
    %v173 = vld [vmem:[#allocation5 + $0x10] sm:$0xff]
    %v174 = vld [vmem:[#allocation5 + $0x18] sm:$0xff]
    %v175 = vld [vmem:[#allocation5 + $0x20] sm:$0xff]
    %v176 = vld [vmem:[#allocation5 + $0x28] sm:$0xff]
    %v177 = vld [vmem:[#allocation5 + $0x30] sm:$0xff]
    %v178 = vld [vmem:[#allocation5 + $0x38] sm:$0xff]
    %v179 = vld [vmem:[#allocation5 + $0x40] sm:$0xff]
    %v180 = vld [vmem:[#allocation5 + $0x48] sm:$0xff]
    %v181 = vld [vmem:[#allocation5 + $0x50] sm:$0xff]
    %v182 = vld [vmem:[#allocation5 + $0x58] sm:$0xff]
    %v183 = vld [vmem:[#allocation5 + $0x60] sm:$0xff]
    %v184 = vld [vmem:[#allocation5 + $0x68] sm:$0xff]
    %v185 = vld [vmem:[#allocation5 + $0x70] sm:$0xff]
    %v186 = vld [vmem:[#allocation5 + $0x78] sm:$0xff]
    %v187 = vld [vmem:[#allocation5 + $0x80] sm:$0xff]
    %v188 = vld [vmem:[#allocation5 + $0x88] sm:$0xff]
    %v189 = vld [vmem:[#allocation5 + $0x90] sm:$0xff]
    %v190 = vld [vmem:[#allocation5 + $0x98] sm:$0xff]
    %v191 = vld [vmem:[#allocation5 + $0xa0] sm:$0xff]
    %v192 = vld [vmem:[#allocation5 + $0xa8] sm:$0xff]
    %v193 = vld [vmem:[#allocation5 + $0xb0] sm:$0xff]
    %v194 = vld [vmem:[#allocation5 + $0xb8] sm:$0xff]
    %v195 = vld [vmem:[#allocation5 + $0xc0] sm:$0xff]
    %v196 = vld [vmem:[#allocation5 + $0xc8] sm:$0xff]
    %v197 = vld [vmem:[#allocation5 + $0xd0] sm:$0xff]
    %v198 = vld [vmem:[#allocation5 + $0xd8] sm:$0xff]
    %v199 = vld [vmem:[#allocation5 + $0xe0] sm:$0xff]
    %v200 = vld [vmem:[#allocation5 + $0xe8] sm:$0xff]
    %v201 = vld [vmem:[#allocation5 + $0xf0] sm:$0xff]
    %v202 = vld [vmem:[#allocation5 + $0xf8] sm:$0xff]
    %v203 = vld [vmem:[%s2] sm:$0x3]
    %v205 = vlaneseq
    %v206 = vshrl.u32 %v205, 7
    %v207 = vsub.s32 0, %v206
    %v208 = vrot.slane %v203, %v207
    %v209 = vlaneseq
    %v210 = vshrl.u32 %v209, 7
    %v211 = vsub.s32 1, %v210
    %v212 = vrot.slane %v203, %v211
    %v247 = vunpack.c.l.b16 %v171
    %v248 = vunpack.c.h.b16 %v171
    %v249 = vunpack.c.l.b16 %v172
    %v250 = vunpack.c.h.b16 %v172
    %v251 = vunpack.c.l.b16 %v173
    %v252 = vunpack.c.h.b16 %v173
    %v253 = vunpack.c.l.b16 %v174
    %v254 = vunpack.c.h.b16 %v174
    %v255 = vunpack.c.l.b16 %v175
    %v256 = vunpack.c.h.b16 %v175
    %v257 = vunpack.c.l.b16 %v176
    %v258 = vunpack.c.h.b16 %v176
    %v259 = vunpack.c.l.b16 %v177
    %v260 = vunpack.c.h.b16 %v177
    %v261 = vunpack.c.l.b16 %v178
    %v262 = vunpack.c.h.b16 %v178
    %v263 = vunpack.c.l.b16 %v179
    %v264 = vunpack.c.h.b16 %v179
    %v265 = vunpack.c.l.b16 %v180
    %v266 = vunpack.c.h.b16 %v180
    %v267 = vunpack.c.l.b16 %v181
    %v268 = vunpack.c.h.b16 %v181
    %v269 = vunpack.c.l.b16 %v182
    %v270 = vunpack.c.h.b16 %v182
    %v271 = vunpack.c.l.b16 %v183
    %v272 = vunpack.c.h.b16 %v183
    %v273 = vunpack.c.l.b16 %v184
    %v274 = vunpack.c.h.b16 %v184
    %v275 = vunpack.c.l.b16 %v185
    %v276 = vunpack.c.h.b16 %v185
    %v277 = vunpack.c.l.b16 %v186
    %v278 = vunpack.c.h.b16 %v186
    %v279 = vunpack.c.l.b16 %v187
    %v280 = vunpack.c.h.b16 %v187
    %v281 = vunpack.c.l.b16 %v188
    %v282 = vunpack.c.h.b16 %v188
    %v283 = vunpack.c.l.b16 %v189
    %v284 = vunpack.c.h.b16 %v189
    %v285 = vunpack.c.l.b16 %v190
    %v286 = vunpack.c.h.b16 %v190
    %v287 = vunpack.c.l.b16 %v191
    %v288 = vunpack.c.h.b16 %v191
    %v289 = vunpack.c.l.b16 %v192
    %v290 = vunpack.c.h.b16 %v192
    %v291 = vunpack.c.l.b16 %v193
    %v292 = vunpack.c.h.b16 %v193
    %v293 = vunpack.c.l.b16 %v194
    %v294 = vunpack.c.h.b16 %v194
    %v295 = vunpack.c.l.b16 %v195
    %v296 = vunpack.c.h.b16 %v195
    %v297 = vunpack.c.l.b16 %v196
    %v298 = vunpack.c.h.b16 %v196
    %v299 = vunpack.c.l.b16 %v197
    %v300 = vunpack.c.h.b16 %v197
    %v301 = vunpack.c.l.b16 %v198
    %v302 = vunpack.c.h.b16 %v198
    %v303 = vunpack.c.l.b16 %v199
    %v304 = vunpack.c.h.b16 %v199
    %v305 = vunpack.c.l.b16 %v200
    %v306 = vunpack.c.h.b16 %v200
    %v307 = vunpack.c.l.b16 %v201
    %v308 = vunpack.c.h.b16 %v201
    %v309 = vunpack.c.l.b16 %v202
    %v310 = vunpack.c.h.b16 %v202
    %v311 = vpack.c.b16 %v249, %v247
    %v312 = vpack.c.b16 %v250, %v248
    %v313 = vpack.c.b16 %v253, %v251
    %v314 = vpack.c.b16 %v254, %v252
    %v315 = vpack.c.b16 %v257, %v255
    %v316 = vpack.c.b16 %v258, %v256
    %v317 = vpack.c.b16 %v261, %v259
    %v318 = vpack.c.b16 %v262, %v260
    %v319 = vpack.c.b16 %v265, %v263
    %v320 = vpack.c.b16 %v266, %v264
    %v321 = vpack.c.b16 %v269, %v267
    %v322 = vpack.c.b16 %v270, %v268
    %v323 = vpack.c.b16 %v273, %v271
    %v324 = vpack.c.b16 %v274, %v272
    %v325 = vpack.c.b16 %v277, %v275
    %v326 = vpack.c.b16 %v278, %v276
    %v327 = vpack.c.b16 %v281, %v279
    %v328 = vpack.c.b16 %v282, %v280
    %v329 = vpack.c.b16 %v285, %v283
    %v330 = vpack.c.b16 %v286, %v284
    %v331 = vpack.c.b16 %v289, %v287
    %v332 = vpack.c.b16 %v290, %v288
    %v333 = vpack.c.b16 %v293, %v291
    %v334 = vpack.c.b16 %v294, %v292
    %v335 = vpack.c.b16 %v297, %v295
    %v336 = vpack.c.b16 %v298, %v296
    %v337 = vpack.c.b16 %v301, %v299
    %v338 = vpack.c.b16 %v302, %v300
    %v339 = vpack.c.b16 %v305, %v303
    %v340 = vpack.c.b16 %v306, %v304
    %v341 = vpack.c.b16 %v309, %v307
    %v342 = vpack.c.b16 %v310, %v308
    %375 = vmatprep.subr.bf16.mxu0 %v312
    %376 = vmatpush1.bf16.msra.mxu0 %v311
    %377 = vmatprep.subr.bf16.mxu0 %v314
    %378 = vmatpush1.bf16.msra.mxu0 %v313
    %379 = vmatprep.subr.bf16.mxu0 %v316
    %380 = vmatpush1.bf16.msra.mxu0 %v315
    %381 = vmatprep.subr.bf16.mxu0 %v318
    %382 = vmatpush1.bf16.msra.mxu0 %v317
    %383 = vmatprep.subr.bf16.mxu0 %v320
    %384 = vmatpush1.bf16.msra.mxu0 %v319
    %385 = vmatprep.subr.bf16.mxu0 %v322
    %386 = vmatpush1.bf16.msra.mxu0 %v321
    %387 = vmatprep.subr.bf16.mxu0 %v324
    %388 = vmatpush1.bf16.msra.mxu0 %v323
    %389 = vmatprep.subr.bf16.mxu0 %v326
    %390 = vmatpush1.bf16.msra.mxu0 %v325
    %391 = vmatprep.subr.bf16.mxu0 %v328
    %392 = vmatpush1.bf16.msra.mxu0 %v327
    %393 = vmatprep.subr.bf16.mxu0 %v330
    %394 = vmatpush1.bf16.msra.mxu0 %v329
    %395 = vmatprep.subr.bf16.mxu0 %v332
    %396 = vmatpush1.bf16.msra.mxu0 %v331
    %397 = vmatprep.subr.bf16.mxu0 %v334
    %398 = vmatpush1.bf16.msra.mxu0 %v333
    %399 = vmatprep.subr.bf16.mxu0 %v336
    %400 = vmatpush1.bf16.msra.mxu0 %v335
    %401 = vmatprep.subr.bf16.mxu0 %v338
    %402 = vmatpush1.bf16.msra.mxu0 %v337
    %403 = vmatprep.subr.bf16.mxu0 %v340
    %404 = vmatpush1.bf16.msra.mxu0 %v339
    %405 = vmatprep.subr.bf16.mxu0 %v342
    %406 = vmatpush1.bf16.msra.mxu0 %v341
    %407 = vmatprep.mubr.bf16.mxu0 %v164
    %408 = vmatmul.mubr.bf16.gmra.mrb[0].mxu0 %v163
    %v409 = vpop.f32.mrb[0].mxu0
    %v410 = vadd.f32 %v208, %v409
    %v411 = vpop.f32.mrb[0].mxu0
    %v412 = vadd.f32 %v212, %v411
    %v413 = vpop.f32.mrb[0].mxu0
    %v414 = vadd.f32 %v208, %v413
    %v415 = vpop.f32.mrb[0].mxu0
    %v416 = vadd.f32 %v212, %v415
    %417 = vmatprep.mubr.bf16.mxu0 %v166
    %418 = vmatmul.mubr.bf16.gmra.mrb[0].mxu0 %v165
    %v419 = vpop.f32.mrb[0].mxu0
    %v420 = vadd.f32 %v208, %v419
    %v421 = vpop.f32.mrb[0].mxu0
    %v422 = vadd.f32 %v212, %v421
    %v423 = vpop.f32.mrb[0].mxu0
    %v424 = vadd.f32 %v208, %v423
    %v425 = vpop.f32.mrb[0].mxu0
    %v426 = vadd.f32 %v212, %v425
    %427 = vmatprep.mubr.bf16.mxu0 %v168
    %428 = vmatmul.mubr.bf16.gmra.mrb[0].mxu0 %v167
    %v429 = vpop.f32.mrb[0].mxu0
    %v430 = vadd.f32 %v208, %v429
    %v431 = vpop.f32.mrb[0].mxu0
    %v432 = vadd.f32 %v212, %v431
    %v433 = vpop.f32.mrb[0].mxu0
    %v434 = vadd.f32 %v208, %v433
    %v435 = vpop.f32.mrb[0].mxu0
    %v436 = vadd.f32 %v212, %v435
    %437 = vmatprep.mubr.bf16.mxu0 %v170
    %438 = vmatmul.mubr.bf16.gmra.mrb[0].mxu0 %v169
    %v439 = vpop.f32.mrb[0].mxu0
    %v440 = vadd.f32 %v208, %v439
    %v441 = vpop.f32.mrb[0].mxu0
    %v442 = vadd.f32 %v212, %v441
    %v443 = vpop.f32.mrb[0].mxu0
    %v444 = vadd.f32 %v208, %v443
    %v445 = vpop.f32.mrb[0].mxu0
    %v446 = vadd.f32 %v212, %v445
    %447 = vdwg.mxu0
    %v448 = vmax.f32 %v410, 0.0
    %v449 = vmax.f32 %v412, 0.0
    %v450 = vmax.f32 %v414, 0.0
    %v451 = vmax.f32 %v416, 0.0
    %v452 = vmax.f32 %v420, 0.0
    %v453 = vmax.f32 %v422, 0.0
    %v454 = vmax.f32 %v424, 0.0
    %v455 = vmax.f32 %v426, 0.0
    %v456 = vmax.f32 %v430, 0.0
    %v457 = vmax.f32 %v432, 0.0
    %v458 = vmax.f32 %v434, 0.0
    %v459 = vmax.f32 %v436, 0.0
    %v460 = vmax.f32 %v440, 0.0
    %v461 = vmax.f32 %v442, 0.0
    %v462 = vmax.f32 %v444, 0.0
    %v463 = vmax.f32 %v446, 0.0
    %v464 = vpack.c.bf16 %v450, %v448
    %v465 = vpack.c.bf16 %v451, %v449
    %v466 = vpack.c.bf16 %v454, %v452
    %v467 = vpack.c.bf16 %v455, %v453
    %v468 = vpack.c.bf16 %v458, %v456
    %v469 = vpack.c.bf16 %v459, %v457
    %v470 = vpack.c.bf16 %v462, %v460
    %v471 = vpack.c.bf16 %v463, %v461
    %v472 = vld [vmem:[#allocation7] sm:$0xff]
    %v473 = vld [vmem:[#allocation7 + $0x8] sm:$0xff]
    %v474 = vld [vmem:[#allocation7 + $0x10] sm:$0xff]
    %v475 = vld [vmem:[#allocation7 + $0x18] sm:$0xff]
    %v476 = vld [vmem:[#allocation7 + $0x20] sm:$0xff]
    %v477 = vld [vmem:[#allocation7 + $0x28] sm:$0xff]
    %v478 = vld [vmem:[#allocation7 + $0x30] sm:$0xff]
    %v479 = vld [vmem:[#allocation7 + $0x38] sm:$0xff]
    %v480 = vld [vmem:[#allocation7 + $0x40] sm:$0xff]
    %v481 = vld [vmem:[#allocation7 + $0x48] sm:$0xff]
    %v482 = vld [vmem:[#allocation7 + $0x50] sm:$0xff]
    %v483 = vld [vmem:[#allocation7 + $0x58] sm:$0xff]
    %v484 = vld [vmem:[#allocation7 + $0x60] sm:$0xff]
    %v485 = vld [vmem:[#allocation7 + $0x68] sm:$0xff]
    %v486 = vld [vmem:[#allocation7 + $0x70] sm:$0xff]
    %v487 = vld [vmem:[#allocation7 + $0x78] sm:$0xff]
    %v488 = vld [vmem:[#allocation7 + $0x80] sm:$0xff]
    %v489 = vld [vmem:[#allocation7 + $0x88] sm:$0xff]
    %v490 = vld [vmem:[#allocation7 + $0x90] sm:$0xff]
    %v491 = vld [vmem:[#allocation7 + $0x98] sm:$0xff]
    %v492 = vld [vmem:[#allocation7 + $0xa0] sm:$0xff]
    %v493 = vld [vmem:[#allocation7 + $0xa8] sm:$0xff]
    %v494 = vld [vmem:[#allocation7 + $0xb0] sm:$0xff]
    %v495 = vld [vmem:[#allocation7 + $0xb8] sm:$0xff]
    %v496 = vld [vmem:[#allocation7 + $0xc0] sm:$0xff]
    %v497 = vld [vmem:[#allocation7 + $0xc8] sm:$0xff]
    %v498 = vld [vmem:[#allocation7 + $0xd0] sm:$0xff]
    %v499 = vld [vmem:[#allocation7 + $0xd8] sm:$0xff]
    %v500 = vld [vmem:[#allocation7 + $0xe0] sm:$0xff]
    %v501 = vld [vmem:[#allocation7 + $0xe8] sm:$0xff]
    %v502 = vld [vmem:[#allocation7 + $0xf0] sm:$0xff]
    %v503 = vld [vmem:[#allocation7 + $0xf8] sm:$0xff]
    %v504 = vld [vmem:[%s4] sm:$0x3]
    %v506 = vlaneseq
    %v507 = vshrl.u32 %v506, 7
    %v508 = vsub.s32 0, %v507
    %v509 = vrot.slane %v504, %v508
    %v510 = vlaneseq
    %v511 = vshrl.u32 %v510, 7
    %v512 = vsub.s32 1, %v511
    %v513 = vrot.slane %v504, %v512
    %v548 = vunpack.c.l.b16 %v472
    %v549 = vunpack.c.h.b16 %v472
    %v550 = vunpack.c.l.b16 %v473
    %v551 = vunpack.c.h.b16 %v473
    %v552 = vunpack.c.l.b16 %v474
    %v553 = vunpack.c.h.b16 %v474
    %v554 = vunpack.c.l.b16 %v475
    %v555 = vunpack.c.h.b16 %v475
    %v556 = vunpack.c.l.b16 %v476
    %v557 = vunpack.c.h.b16 %v476
    %v558 = vunpack.c.l.b16 %v477
    %v559 = vunpack.c.h.b16 %v477
    %v560 = vunpack.c.l.b16 %v478
    %v561 = vunpack.c.h.b16 %v478
    %v562 = vunpack.c.l.b16 %v479
    %v563 = vunpack.c.h.b16 %v479
    %v564 = vunpack.c.l.b16 %v480
    %v565 = vunpack.c.h.b16 %v480
    %v566 = vunpack.c.l.b16 %v481
    %v567 = vunpack.c.h.b16 %v481
    %v568 = vunpack.c.l.b16 %v482
    %v569 = vunpack.c.h.b16 %v482
    %v570 = vunpack.c.l.b16 %v483
    %v571 = vunpack.c.h.b16 %v483
    %v572 = vunpack.c.l.b16 %v484
    %v573 = vunpack.c.h.b16 %v484
    %v574 = vunpack.c.l.b16 %v485
    %v575 = vunpack.c.h.b16 %v485
    %v576 = vunpack.c.l.b16 %v486
    %v577 = vunpack.c.h.b16 %v486
    %v578 = vunpack.c.l.b16 %v487
    %v579 = vunpack.c.h.b16 %v487
    %v580 = vunpack.c.l.b16 %v488
    %v581 = vunpack.c.h.b16 %v488
    %v582 = vunpack.c.l.b16 %v489
    %v583 = vunpack.c.h.b16 %v489
    %v584 = vunpack.c.l.b16 %v490
    %v585 = vunpack.c.h.b16 %v490
    %v586 = vunpack.c.l.b16 %v491
    %v587 = vunpack.c.h.b16 %v491
    %v588 = vunpack.c.l.b16 %v492
    %v589 = vunpack.c.h.b16 %v492
    %v590 = vunpack.c.l.b16 %v493
    %v591 = vunpack.c.h.b16 %v493
    %v592 = vunpack.c.l.b16 %v494
    %v593 = vunpack.c.h.b16 %v494
    %v594 = vunpack.c.l.b16 %v495
    %v595 = vunpack.c.h.b16 %v495
    %v596 = vunpack.c.l.b16 %v496
    %v597 = vunpack.c.h.b16 %v496
    %v598 = vunpack.c.l.b16 %v497
    %v599 = vunpack.c.h.b16 %v497
    %v600 = vunpack.c.l.b16 %v498
    %v601 = vunpack.c.h.b16 %v498
    %v602 = vunpack.c.l.b16 %v499
    %v603 = vunpack.c.h.b16 %v499
    %v604 = vunpack.c.l.b16 %v500
    %v605 = vunpack.c.h.b16 %v500
    %v606 = vunpack.c.l.b16 %v501
    %v607 = vunpack.c.h.b16 %v501
    %v608 = vunpack.c.l.b16 %v502
    %v609 = vunpack.c.h.b16 %v502
    %v610 = vunpack.c.l.b16 %v503
    %v611 = vunpack.c.h.b16 %v503
    %v612 = vpack.c.b16 %v550, %v548
    %v613 = vpack.c.b16 %v551, %v549
    %v614 = vpack.c.b16 %v554, %v552
    %v615 = vpack.c.b16 %v555, %v553
    %v616 = vpack.c.b16 %v558, %v556
    %v617 = vpack.c.b16 %v559, %v557
    %v618 = vpack.c.b16 %v562, %v560
    %v619 = vpack.c.b16 %v563, %v561
    %v620 = vpack.c.b16 %v566, %v564
    %v621 = vpack.c.b16 %v567, %v565
    %v622 = vpack.c.b16 %v570, %v568
    %v623 = vpack.c.b16 %v571, %v569
    %v624 = vpack.c.b16 %v574, %v572
    %v625 = vpack.c.b16 %v575, %v573
    %v626 = vpack.c.b16 %v578, %v576
    %v627 = vpack.c.b16 %v579, %v577
    %v628 = vpack.c.b16 %v582, %v580
    %v629 = vpack.c.b16 %v583, %v581
    %v630 = vpack.c.b16 %v586, %v584
    %v631 = vpack.c.b16 %v587, %v585
    %v632 = vpack.c.b16 %v590, %v588
    %v633 = vpack.c.b16 %v591, %v589
    %v634 = vpack.c.b16 %v594, %v592
    %v635 = vpack.c.b16 %v595, %v593
    %v636 = vpack.c.b16 %v598, %v596
    %v637 = vpack.c.b16 %v599, %v597
    %v638 = vpack.c.b16 %v602, %v600
    %v639 = vpack.c.b16 %v603, %v601
    %v640 = vpack.c.b16 %v606, %v604
    %v641 = vpack.c.b16 %v607, %v605
    %v642 = vpack.c.b16 %v610, %v608
    %v643 = vpack.c.b16 %v611, %v609
    %676 = vmatprep.subr.bf16.mxu0 %v613
    %677 = vmatpush1.bf16.msra.mxu0 %v612
    %678 = vmatprep.subr.bf16.mxu0 %v615
    %679 = vmatpush1.bf16.msra.mxu0 %v614
    %680 = vmatprep.subr.bf16.mxu0 %v617
    %681 = vmatpush1.bf16.msra.mxu0 %v616
    %682 = vmatprep.subr.bf16.mxu0 %v619
    %683 = vmatpush1.bf16.msra.mxu0 %v618
    %684 = vmatprep.subr.bf16.mxu0 %v621
    %685 = vmatpush1.bf16.msra.mxu0 %v620
    %686 = vmatprep.subr.bf16.mxu0 %v623
    %687 = vmatpush1.bf16.msra.mxu0 %v622
    %688 = vmatprep.subr.bf16.mxu0 %v625
    %689 = vmatpush1.bf16.msra.mxu0 %v624
    %690 = vmatprep.subr.bf16.mxu0 %v627
    %691 = vmatpush1.bf16.msra.mxu0 %v626
    %692 = vmatprep.subr.bf16.mxu0 %v629
    %693 = vmatpush1.bf16.msra.mxu0 %v628
    %694 = vmatprep.subr.bf16.mxu0 %v631
    %695 = vmatpush1.bf16.msra.mxu0 %v630
    %696 = vmatprep.subr.bf16.mxu0 %v633
    %697 = vmatpush1.bf16.msra.mxu0 %v632
    %698 = vmatprep.subr.bf16.mxu0 %v635
    %699 = vmatpush1.bf16.msra.mxu0 %v634
    %700 = vmatprep.subr.bf16.mxu0 %v637
    %701 = vmatpush1.bf16.msra.mxu0 %v636
    %702 = vmatprep.subr.bf16.mxu0 %v639
    %703 = vmatpush1.bf16.msra.mxu0 %v638
    %704 = vmatprep.subr.bf16.mxu0 %v641
    %705 = vmatpush1.bf16.msra.mxu0 %v640
    %706 = vmatprep.subr.bf16.mxu0 %v643
    %707 = vmatpush1.bf16.msra.mxu0 %v642
    %708 = vmatprep.mubr.bf16.mxu0 %v465
    %709 = vmatmul.mubr.bf16.gmra.mrb[0].mxu0 %v464
    %v710 = vpop.f32.mrb[0].mxu0
    %v711 = vadd.f32 %v509, %v710
    %v712 = vpop.f32.mrb[0].mxu0
    %v713 = vadd.f32 %v513, %v712
    %v714 = vpop.f32.mrb[0].mxu0
    %v715 = vadd.f32 %v509, %v714
    %v716 = vpop.f32.mrb[0].mxu0
    %v717 = vadd.f32 %v513, %v716
    %718 = vmatprep.mubr.bf16.mxu0 %v467
    %719 = vmatmul.mubr.bf16.gmra.mrb[0].mxu0 %v466
    %v720 = vpop.f32.mrb[0].mxu0
    %v721 = vadd.f32 %v509, %v720
    %v722 = vpop.f32.mrb[0].mxu0
    %v723 = vadd.f32 %v513, %v722
    %v724 = vpop.f32.mrb[0].mxu0
    %v725 = vadd.f32 %v509, %v724
    %v726 = vpop.f32.mrb[0].mxu0
    %v727 = vadd.f32 %v513, %v726
    %728 = vmatprep.mubr.bf16.mxu0 %v469
    %729 = vmatmul.mubr.bf16.gmra.mrb[0].mxu0 %v468
    %v730 = vpop.f32.mrb[0].mxu0
    %v731 = vadd.f32 %v509, %v730
    %v732 = vpop.f32.mrb[0].mxu0
    %v733 = vadd.f32 %v513, %v732
    %v734 = vpop.f32.mrb[0].mxu0
    %v735 = vadd.f32 %v509, %v734
    %v736 = vpop.f32.mrb[0].mxu0
    %v737 = vadd.f32 %v513, %v736
    %738 = vmatprep.mubr.bf16.mxu0 %v471
    %739 = vmatmul.mubr.bf16.gmra.mrb[0].mxu0 %v470
    %v740 = vpop.f32.mrb[0].mxu0
    %v741 = vadd.f32 %v509, %v740
    %v742 = vpop.f32.mrb[0].mxu0
    %v743 = vadd.f32 %v513, %v742
    %v744 = vpop.f32.mrb[0].mxu0
    %v745 = vadd.f32 %v509, %v744
    %v746 = vpop.f32.mrb[0].mxu0
    %v747 = vadd.f32 %v513, %v746
    %748 = vdwg.mxu0
    %v749 = vmax.f32 %v711, 0.0
    %v750 = vmax.f32 %v713, 0.0
    %v751 = vmax.f32 %v715, 0.0
    %v752 = vmax.f32 %v717, 0.0
    %v753 = vmax.f32 %v721, 0.0
    %v754 = vmax.f32 %v723, 0.0
    %v755 = vmax.f32 %v725, 0.0
    %v756 = vmax.f32 %v727, 0.0
    %v757 = vmax.f32 %v731, 0.0
    %v758 = vmax.f32 %v733, 0.0
    %v759 = vmax.f32 %v735, 0.0
    %v760 = vmax.f32 %v737, 0.0
    %v761 = vmax.f32 %v741, 0.0
    %v762 = vmax.f32 %v743, 0.0
    %v763 = vmax.f32 %v745, 0.0
    %v764 = vmax.f32 %v747, 0.0
    %v765 = vpack.c.bf16 %v751, %v749
    %v766 = vpack.c.bf16 %v752, %v750
    %v767 = vpack.c.bf16 %v755, %v753
    %v768 = vpack.c.bf16 %v756, %v754
    %v769 = vpack.c.bf16 %v759, %v757
    %v770 = vpack.c.bf16 %v760, %v758
    %v771 = vpack.c.bf16 %v763, %v761
    %v772 = vpack.c.bf16 %v764, %v762
    %v773 = vld [vmem:[#allocation8] sm:$0xf]
    %v774 = vld [vmem:[#allocation8 + $0x4] sm:$0xf]
    %v775 = vld [vmem:[#allocation8 + $0x8] sm:$0xf]
    %v776 = vld [vmem:[#allocation8 + $0xc] sm:$0xf]
    %v777 = vld [vmem:[#allocation8 + $0x10] sm:$0xf]
    %v778 = vld [vmem:[#allocation8 + $0x14] sm:$0xf]
    %v779 = vld [vmem:[#allocation8 + $0x18] sm:$0xf]
    %v780 = vld [vmem:[#allocation8 + $0x1c] sm:$0xf]
    %v781 = vld [vmem:[#allocation8 + $0x20] sm:$0xf]
    %v782 = vld [vmem:[#allocation8 + $0x24] sm:$0xf]
    %v783 = vld [vmem:[#allocation8 + $0x28] sm:$0xf]
    %v784 = vld [vmem:[#allocation8 + $0x2c] sm:$0xf]
    %v785 = vld [vmem:[#allocation8 + $0x30] sm:$0xf]
    %v786 = vld [vmem:[#allocation8 + $0x34] sm:$0xf]
    %v787 = vld [vmem:[#allocation8 + $0x38] sm:$0xf]
    %v788 = vld [vmem:[#allocation8 + $0x3c] sm:$0xf]
    %v789 = vld [vmem:[#allocation8 + $0x40] sm:$0xf]
    %v790 = vld [vmem:[#allocation8 + $0x44] sm:$0xf]
    %v791 = vld [vmem:[#allocation8 + $0x48] sm:$0xf]
    %v792 = vld [vmem:[#allocation8 + $0x4c] sm:$0xf]
    %v793 = vld [vmem:[#allocation8 + $0x50] sm:$0xf]
    %v794 = vld [vmem:[#allocation8 + $0x54] sm:$0xf]
    %v795 = vld [vmem:[#allocation8 + $0x58] sm:$0xf]
    %v796 = vld [vmem:[#allocation8 + $0x5c] sm:$0xf]
    %v797 = vld [vmem:[#allocation8 + $0x60] sm:$0xf]
    %v798 = vld [vmem:[#allocation8 + $0x64] sm:$0xf]
    %v799 = vld [vmem:[#allocation8 + $0x68] sm:$0xf]
    %v800 = vld [vmem:[#allocation8 + $0x6c] sm:$0xf]
    %v801 = vld [vmem:[#allocation8 + $0x70] sm:$0xf]
    %v802 = vld [vmem:[#allocation8 + $0x74] sm:$0xf]
    %v803 = vld [vmem:[#allocation8 + $0x78] sm:$0xf]
    %v804 = vld [vmem:[#allocation8 + $0x7c] sm:$0xf]
    %v805 = vld [vmem:[%s6] sm:$0x1]
    %v807 = vlaneseq
    %v808 = vshrl.u32 %v807, 7
    %v809 = vsub.s32 0, %v808
    %v810 = vrot.slane %v805, %v809
    %v844 = vunpack.c.l.b16 %v773
    %v845 = vunpack.c.l.b16 %v774
    %v846 = vunpack.c.l.b16 %v775
    %v847 = vunpack.c.l.b16 %v776
    %v848 = vunpack.c.l.b16 %v777
    %v849 = vunpack.c.l.b16 %v778
    %v850 = vunpack.c.l.b16 %v779
    %v851 = vunpack.c.l.b16 %v780
    %v852 = vunpack.c.l.b16 %v781
    %v853 = vunpack.c.l.b16 %v782
    %v854 = vunpack.c.l.b16 %v783
    %v855 = vunpack.c.l.b16 %v784
    %v856 = vunpack.c.l.b16 %v785
    %v857 = vunpack.c.l.b16 %v786
    %v858 = vunpack.c.l.b16 %v787
    %v859 = vunpack.c.l.b16 %v788
    %v860 = vunpack.c.l.b16 %v789
    %v861 = vunpack.c.l.b16 %v790
    %v862 = vunpack.c.l.b16 %v791
    %v863 = vunpack.c.l.b16 %v792
    %v864 = vunpack.c.l.b16 %v793
    %v865 = vunpack.c.l.b16 %v794
    %v866 = vunpack.c.l.b16 %v795
    %v867 = vunpack.c.l.b16 %v796
    %v868 = vunpack.c.l.b16 %v797
    %v869 = vunpack.c.l.b16 %v798
    %v870 = vunpack.c.l.b16 %v799
    %v871 = vunpack.c.l.b16 %v800
    %v872 = vunpack.c.l.b16 %v801
    %v873 = vunpack.c.l.b16 %v802
    %v874 = vunpack.c.l.b16 %v803
    %v875 = vunpack.c.l.b16 %v804
    %v876 = vpack.c.b16 %v845, %v844
    %v877 = vpack.c.b16 %v847, %v846
    %v878 = vpack.c.b16 %v849, %v848
    %v879 = vpack.c.b16 %v851, %v850
    %v880 = vpack.c.b16 %v853, %v852
    %v881 = vpack.c.b16 %v855, %v854
    %v882 = vpack.c.b16 %v857, %v856
    %v883 = vpack.c.b16 %v859, %v858
    %v884 = vpack.c.b16 %v861, %v860
    %v885 = vpack.c.b16 %v863, %v862
    %v886 = vpack.c.b16 %v865, %v864
    %v887 = vpack.c.b16 %v867, %v866
    %v888 = vpack.c.b16 %v869, %v868
    %v889 = vpack.c.b16 %v871, %v870
    %v890 = vpack.c.b16 %v873, %v872
    %v891 = vpack.c.b16 %v875, %v874
    %908 = vmatprep.subr.bf16.mxu0 0
    %909 = vmatpush1.bf16.msra.mxu0 %v876
    %910 = vmatprep.subr.bf16.mxu0 0
    %911 = vmatpush1.bf16.msra.mxu0 %v877
    %912 = vmatprep.subr.bf16.mxu0 0
    %913 = vmatpush1.bf16.msra.mxu0 %v878
    %914 = vmatprep.subr.bf16.mxu0 0
    %915 = vmatpush1.bf16.msra.mxu0 %v879
    %916 = vmatprep.subr.bf16.mxu0 0
    %917 = vmatpush1.bf16.msra.mxu0 %v880
    %918 = vmatprep.subr.bf16.mxu0 0
    %919 = vmatpush1.bf16.msra.mxu0 %v881
    %920 = vmatprep.subr.bf16.mxu0 0
    %921 = vmatpush1.bf16.msra.mxu0 %v882
    %922 = vmatprep.subr.bf16.mxu0 0
    %923 = vmatpush1.bf16.msra.mxu0 %v883
    %924 = vmatprep.subr.bf16.mxu0 0
    %925 = vmatpush1.bf16.msra.mxu0 %v884
    %926 = vmatprep.subr.bf16.mxu0 0
    %927 = vmatpush1.bf16.msra.mxu0 %v885
    %928 = vmatprep.subr.bf16.mxu0 0
    %929 = vmatpush1.bf16.msra.mxu0 %v886
    %930 = vmatprep.subr.bf16.mxu0 0
    %931 = vmatpush1.bf16.msra.mxu0 %v887
    %932 = vmatprep.subr.bf16.mxu0 0
    %933 = vmatpush1.bf16.msra.mxu0 %v888
    %934 = vmatprep.subr.bf16.mxu0 0
    %935 = vmatpush1.bf16.msra.mxu0 %v889
    %936 = vmatprep.subr.bf16.mxu0 0
    %937 = vmatpush1.bf16.msra.mxu0 %v890
    %938 = vmatprep.subr.bf16.mxu0 0
    %939 = vmatpush1.bf16.msra.mxu0 %v891
    %940 = vmatprep.mubr.bf16.mxu0 %v766
    %941 = vmatmul.mubr.bf16.gmra.mrb[0].mxu0 %v765
    %v942 = vpop.f32.mrb[0].mxu0
    %v943 = vadd.f32 %v810, %v942
    %v944 = vpop.f32.mrb[0].mxu0
    %v945 = vpop.f32.mrb[0].mxu0
    %v946 = vadd.f32 %v810, %v945
    %v947 = vpop.f32.mrb[0].mxu0
    %948 = vmatprep.mubr.bf16.mxu0 %v768
    %949 = vmatmul.mubr.bf16.gmra.mrb[0].mxu0 %v767
    %v950 = vpop.f32.mrb[0].mxu0
    %v951 = vadd.f32 %v810, %v950
    %v952 = vpop.f32.mrb[0].mxu0
    %v953 = vpop.f32.mrb[0].mxu0
    %v954 = vadd.f32 %v810, %v953
    %v955 = vpop.f32.mrb[0].mxu0
    %956 = vmatprep.mubr.bf16.mxu0 %v770
    %957 = vmatmul.mubr.bf16.gmra.mrb[0].mxu0 %v769
    %v958 = vpop.f32.mrb[0].mxu0
    %v959 = vadd.f32 %v810, %v958
    %v960 = vpop.f32.mrb[0].mxu0
    %v961 = vpop.f32.mrb[0].mxu0
    %v962 = vadd.f32 %v810, %v961
    %v963 = vpop.f32.mrb[0].mxu0
    %964 = vmatprep.mubr.bf16.mxu0 %v772
    %965 = vmatmul.mubr.bf16.gmra.mrb[0].mxu0 %v771
    %v966 = vpop.f32.mrb[0].mxu0
    %v967 = vadd.f32 %v810, %v966
    %v968 = vpop.f32.mrb[0].mxu0
    %v969 = vpop.f32.mrb[0].mxu0
    %v970 = vadd.f32 %v810, %v969
    %v971 = vpop.f32.mrb[0].mxu0
    %972 = vdwg.mxu0
    %v973 = vmax.f32 %v943, 0.0
    %v974 = vmax.f32 %v946, 0.0
    %v975 = vmax.f32 %v951, 0.0
    %v976 = vmax.f32 %v954, 0.0
    %v977 = vmax.f32 %v959, 0.0
    %v978 = vmax.f32 %v962, 0.0
    %v979 = vmax.f32 %v967, 0.0
    %v980 = vmax.f32 %v970, 0.0
    %v981 = vpack.c.bf16 %v974, %v973
    %v982 = vpack.c.bf16 %v976, %v975
    %v983 = vpack.c.bf16 %v978, %v977
    %v984 = vpack.c.bf16 %v980, %v979
    %v985 = vld [vmem:[#allocation10] sm:$0xff]
    %v986 = vld [vmem:[#allocation10 + $0x8] sm:$0xff]
    %v987 = vld [vmem:[#allocation10 + $0x10] sm:$0xff]
    %v988 = vld [vmem:[#allocation10 + $0x18] sm:$0xff]
    %v989 = vld [vmem:[#allocation10 + $0x20] sm:$0xff]
    %v990 = vld [vmem:[#allocation10 + $0x28] sm:$0xff]
    %v991 = vld [vmem:[#allocation10 + $0x30] sm:$0xff]
    %v992 = vld [vmem:[#allocation10 + $0x38] sm:$0xff]
    %v993 = vld [vmem:[#allocation10 + $0x40] sm:$0xff]
    %v994 = vld [vmem:[#allocation10 + $0x48] sm:$0xff]
    %v995 = vld [vmem:[#allocation10 + $0x50] sm:$0xff]
    %v996 = vld [vmem:[#allocation10 + $0x58] sm:$0xff]
    %v997 = vld [vmem:[#allocation10 + $0x60] sm:$0xff]
    %v998 = vld [vmem:[#allocation10 + $0x68] sm:$0xff]
    %v999 = vld [vmem:[#allocation10 + $0x70] sm:$0xff]
    %v1000 = vld [vmem:[#allocation10 + $0x78] sm:$0xff]
    %v1001 = vld [vmem:[%s8] sm:$0x3]
    %v1003 = vlaneseq
    %v1004 = vshrl.u32 %v1003, 7
    %v1005 = vsub.s32 0, %v1004
    %v1006 = vrot.slane %v1001, %v1005
    %v1007 = vlaneseq
    %v1008 = vshrl.u32 %v1007, 7
    %v1009 = vsub.s32 1, %v1008
    %v1010 = vrot.slane %v1001, %v1009
    %v1029 = vunpack.c.l.b16 %v985
    %v1030 = vunpack.c.h.b16 %v985
    %v1031 = vunpack.c.l.b16 %v986
    %v1032 = vunpack.c.h.b16 %v986
    %v1033 = vunpack.c.l.b16 %v987
    %v1034 = vunpack.c.h.b16 %v987
    %v1035 = vunpack.c.l.b16 %v988
    %v1036 = vunpack.c.h.b16 %v988
    %v1037 = vunpack.c.l.b16 %v989
    %v1038 = vunpack.c.h.b16 %v989
    %v1039 = vunpack.c.l.b16 %v990
    %v1040 = vunpack.c.h.b16 %v990
    %v1041 = vunpack.c.l.b16 %v991
    %v1042 = vunpack.c.h.b16 %v991
    %v1043 = vunpack.c.l.b16 %v992
    %v1044 = vunpack.c.h.b16 %v992
    %v1045 = vunpack.c.l.b16 %v993
    %v1046 = vunpack.c.h.b16 %v993
    %v1047 = vunpack.c.l.b16 %v994
    %v1048 = vunpack.c.h.b16 %v994
    %v1049 = vunpack.c.l.b16 %v995
    %v1050 = vunpack.c.h.b16 %v995
    %v1051 = vunpack.c.l.b16 %v996
    %v1052 = vunpack.c.h.b16 %v996
    %v1053 = vunpack.c.l.b16 %v997
    %v1054 = vunpack.c.h.b16 %v997
    %v1055 = vunpack.c.l.b16 %v998
    %v1056 = vunpack.c.h.b16 %v998
    %v1057 = vunpack.c.l.b16 %v999
    %v1058 = vunpack.c.h.b16 %v999
    %v1059 = vunpack.c.l.b16 %v1000
    %v1060 = vunpack.c.h.b16 %v1000
    %v1061 = vpack.c.b16 %v1031, %v1029
    %v1062 = vpack.c.b16 %v1032, %v1030
    %v1063 = vpack.c.b16 %v1035, %v1033
    %v1064 = vpack.c.b16 %v1036, %v1034
    %v1065 = vpack.c.b16 %v1039, %v1037
    %v1066 = vpack.c.b16 %v1040, %v1038
    %v1067 = vpack.c.b16 %v1043, %v1041
    %v1068 = vpack.c.b16 %v1044, %v1042
    %v1069 = vpack.c.b16 %v1047, %v1045
    %v1070 = vpack.c.b16 %v1048, %v1046
    %v1071 = vpack.c.b16 %v1051, %v1049
    %v1072 = vpack.c.b16 %v1052, %v1050
    %v1073 = vpack.c.b16 %v1055, %v1053
    %v1074 = vpack.c.b16 %v1056, %v1054
    %v1075 = vpack.c.b16 %v1059, %v1057
    %v1076 = vpack.c.b16 %v1060, %v1058
    %1093 = vmatprep.subr.bf16.mxu0 %v1062
    %1094 = vmatpush1.bf16.msra.mxu0 %v1061
    %1095 = vmatprep.subr.bf16.mxu0 %v1064
    %1096 = vmatpush1.bf16.msra.mxu0 %v1063
    %1097 = vmatprep.subr.bf16.mxu0 %v1066
    %1098 = vmatpush1.bf16.msra.mxu0 %v1065
    %1099 = vmatprep.subr.bf16.mxu0 %v1068
    %1100 = vmatpush1.bf16.msra.mxu0 %v1067
    %1101 = vmatprep.subr.bf16.mxu0 %v1070
    %1102 = vmatpush1.bf16.msra.mxu0 %v1069
    %1103 = vmatprep.subr.bf16.mxu0 %v1072
    %1104 = vmatpush1.bf16.msra.mxu0 %v1071
    %1105 = vmatprep.subr.bf16.mxu0 %v1074
    %1106 = vmatpush1.bf16.msra.mxu0 %v1073
    %1107 = vmatprep.subr.bf16.mxu0 %v1076
    %1108 = vmatpush1.bf16.msra.mxu0 %v1075
    %1109 = vmatprep.subr.bf16.mxu0 0
    %1110 = vmatpush1.bf16.msra.mxu0 0
    %1111 = vmatprep.subr.bf16.mxu0 0
    %1112 = vmatpush1.bf16.msra.mxu0 0
    %1113 = vmatprep.subr.bf16.mxu0 0
    %1114 = vmatpush1.bf16.msra.mxu0 0
    %1115 = vmatprep.subr.bf16.mxu0 0
    %1116 = vmatpush1.bf16.msra.mxu0 0
    %1117 = vmatprep.subr.bf16.mxu0 0
    %1118 = vmatpush1.bf16.msra.mxu0 0
    %1119 = vmatprep.subr.bf16.mxu0 0
    %1120 = vmatpush1.bf16.msra.mxu0 0
    %1121 = vmatprep.subr.bf16.mxu0 0
    %1122 = vmatpush1.bf16.msra.mxu0 0
    %1123 = vmatprep.subr.bf16.mxu0 0
    %1124 = vmatpush1.bf16.msra.mxu0 0
    %1125 = vmatprep.mubr.bf16.mxu0 0
    %1126 = vmatmul.mubr.bf16.gmra.mrb[0].mxu0 %v981
    %v1127 = vpop.f32.mrb[0].mxu0
    %v1128 = vadd.f32 %v1006, %v1127
    %v1129 = vpop.f32.mrb[0].mxu0
    %v1130 = vadd.f32 %v1010, %v1129
    %v1131 = vpop.f32.mrb[0].mxu0
    %v1132 = vadd.f32 %v1006, %v1131
    %v1133 = vpop.f32.mrb[0].mxu0
    %v1134 = vadd.f32 %v1010, %v1133
    %1135 = vmatprep.mubr.bf16.mxu0 0
    %1136 = vmatmul.mubr.bf16.gmra.mrb[0].mxu0 %v982
    %v1137 = vpop.f32.mrb[0].mxu0
    %v1138 = vadd.f32 %v1006, %v1137
    %v1139 = vpop.f32.mrb[0].mxu0
    %v1140 = vadd.f32 %v1010, %v1139
    %v1141 = vpop.f32.mrb[0].mxu0
    %v1142 = vadd.f32 %v1006, %v1141
    %v1143 = vpop.f32.mrb[0].mxu0
    %v1144 = vadd.f32 %v1010, %v1143
    %1145 = vmatprep.mubr.bf16.mxu0 0
    %1146 = vmatmul.mubr.bf16.gmra.mrb[0].mxu0 %v983
    %v1147 = vpop.f32.mrb[0].mxu0
    %v1148 = vadd.f32 %v1006, %v1147
    %v1149 = vpop.f32.mrb[0].mxu0
    %v1150 = vadd.f32 %v1010, %v1149
    %v1151 = vpop.f32.mrb[0].mxu0
    %v1152 = vadd.f32 %v1006, %v1151
    %v1153 = vpop.f32.mrb[0].mxu0
    %v1154 = vadd.f32 %v1010, %v1153
    %1155 = vmatprep.mubr.bf16.mxu0 0
    %1156 = vmatmul.mubr.bf16.gmra.mrb[0].mxu0 %v984
    %v1157 = vpop.f32.mrb[0].mxu0
    %v1158 = vadd.f32 %v1006, %v1157
    %v1159 = vpop.f32.mrb[0].mxu0
    %v1160 = vadd.f32 %v1010, %v1159
    %v1161 = vpop.f32.mrb[0].mxu0
    %v1162 = vadd.f32 %v1006, %v1161
    %v1163 = vpop.f32.mrb[0].mxu0
    %v1164 = vadd.f32 %v1010, %v1163
    %1165 = vdwg.mxu0
    %v1166 = vld [vmem:[%s9] sm:$0xff]
    %v1167 = vld [vmem:[%s9 + $0x8] sm:$0xff]
    %v1168 = vld [vmem:[%s9 + $0x10] sm:$0xff]
    %v1169 = vld [vmem:[%s9 + $0x18] sm:$0xff]
    %v1170 = vld [vmem:[%s9 + $0x20] sm:$0xff]
    %v1171 = vld [vmem:[%s9 + $0x28] sm:$0xff]
    %v1172 = vld [vmem:[%s9 + $0x30] sm:$0xff]
    %v1173 = vld [vmem:[%s9 + $0x38] sm:$0xff]
    %v1174 = vld [vmem:[%s10] sm:$0xff]
    %vm1175 = vcmp.eq.s32.totalorder %v1166, 1
    %vm1176 = vcmp.eq.s32.totalorder %v1167, 1
    %vm1177 = vcmp.eq.s32.totalorder %v1168, 1
    %vm1178 = vcmp.eq.s32.totalorder %v1169, 1
    %vm1179 = vcmp.eq.s32.totalorder %v1170, 1
    %vm1180 = vcmp.eq.s32.totalorder %v1171, 1
    %vm1181 = vcmp.eq.s32.totalorder %v1172, 1
    %vm1182 = vcmp.eq.s32.totalorder %v1173, 1
    %v1183 = vsel %vm1175, 1, 0
    %v1184 = vsel %vm1176, 1, 0
    %v1185 = vsel %vm1177, 1, 0
    %v1186 = vsel %vm1178, 1, 0
    %v1187 = vsel %vm1179, 1, 0
    %v1188 = vsel %vm1180, 1, 0
    %v1189 = vsel %vm1181, 1, 0
    %v1190 = vsel %vm1182, 1, 0
    %1191 = vset.pattern.permute.xlu0 0
    %1192 = vperm.xlu0 %1191, %v1183
    %v1193 = vpop.permute.xlu0 %1192
    %1194 = vset.pattern.permute.xlu0 0
    %1195 = vperm.xlu0 %1194, %v1184
    %v1196 = vpop.permute.xlu0 %1195
    %1197 = vset.pattern.permute.xlu0 0
    %1198 = vperm.xlu0 %1197, %v1185
    %v1199 = vpop.permute.xlu0 %1198
    %1200 = vset.pattern.permute.xlu0 0
    %1201 = vperm.xlu0 %1200, %v1186
    %v1202 = vpop.permute.xlu0 %1201
    %1203 = vset.pattern.permute.xlu0 0
    %1204 = vperm.xlu0 %1203, %v1187
    %v1205 = vpop.permute.xlu0 %1204
    %1206 = vset.pattern.permute.xlu0 0
    %1207 = vperm.xlu0 %1206, %v1188
    %v1208 = vpop.permute.xlu0 %1207
    %1209 = vset.pattern.permute.xlu0 0
    %1210 = vperm.xlu0 %1209, %v1189
    %v1211 = vpop.permute.xlu0 %1210
    %1212 = vset.pattern.permute.xlu0 0
    %1213 = vperm.xlu0 %1212, %v1190
    %v1214 = vpop.permute.xlu0 %1213
    %vm1215 = vcmp.eq.s32.totalorder %v1193, 1
    %vm1216 = vcmp.eq.s32.totalorder %v1196, 1
    %vm1217 = vcmp.eq.s32.totalorder %v1199, 1
    %vm1218 = vcmp.eq.s32.totalorder %v1202, 1
    %vm1219 = vcmp.eq.s32.totalorder %v1205, 1
    %vm1220 = vcmp.eq.s32.totalorder %v1208, 1
    %vm1221 = vcmp.eq.s32.totalorder %v1211, 1
    %vm1222 = vcmp.eq.s32.totalorder %v1214, 1
    %v1224 = vlaneseq
    %v1225 = vshrl.u32 %v1224, 7
    %v1226 = vsub.s32 1, %v1225
    %v1227 = vrot.slane %v1174, %v1226
    %v1228 = vlaneseq
    %v1229 = vshrl.u32 %v1228, 7
    %v1230 = vsub.s32 5, %v1229
    %v1231 = vrot.slane %v1174, %v1230
    %v1234 = vlaneseq
    %v1235 = vshrl.u32 %v1234, 7
    %v1236 = vsub.s32 1, %v1235
    %v1237 = vrot.slane %v1227, %v1236
    %v1238 = vlaneseq
    %v1239 = vshrl.u32 %v1238, 7
    %v1240 = vsub.s32 1, %v1239
    %v1241 = vrot.slane %v1231, %v1240
    %v1242 = vlaneseq
    %v1243 = vshrl.u32 %v1242, 7
    %v1244 = vsub.s32 0, %v1243
    %v1245 = vrot.slane %v1174, %v1244
    %v1246 = vlaneseq
    %v1247 = vshrl.u32 %v1246, 7
    %v1248 = vsub.s32 4, %v1247
    %v1249 = vrot.slane %v1174, %v1248
    %v1252 = vlaneseq
    %v1253 = vshrl.u32 %v1252, 7
    %v1254 = vsub.s32 0, %v1253
    %v1255 = vrot.slane %v1245, %v1254
    %v1256 = vlaneseq
    %v1257 = vshrl.u32 %v1256, 7
    %v1258 = vsub.s32 0, %v1257
    %v1259 = vrot.slane %v1249, %v1258
    %v1260 = vsel %vm1215, %v1237, %v1255
    %v1261 = vsel %vm1215, %v1241, %v1259
    %v1262 = vsel %vm1216, %v1237, %v1255
    %v1263 = vsel %vm1216, %v1241, %v1259
    %v1264 = vsel %vm1217, %v1237, %v1255
    %v1265 = vsel %vm1217, %v1241, %v1259
    %v1266 = vsel %vm1218, %v1237, %v1255
    %v1267 = vsel %vm1218, %v1241, %v1259
    %v1268 = vsel %vm1219, %v1237, %v1255
    %v1269 = vsel %vm1219, %v1241, %v1259
    %v1270 = vsel %vm1220, %v1237, %v1255
    %v1271 = vsel %vm1220, %v1241, %v1259
    %v1272 = vsel %vm1221, %v1237, %v1255
    %v1273 = vsel %vm1221, %v1241, %v1259
    %v1274 = vsel %vm1222, %v1237, %v1255
    %v1275 = vsel %vm1222, %v1241, %v1259
    %vm1276 = vcmp.eq.s32.totalorder %v1166, 3
    %vm1277 = vcmp.eq.s32.totalorder %v1167, 3
    %vm1278 = vcmp.eq.s32.totalorder %v1168, 3
    %vm1279 = vcmp.eq.s32.totalorder %v1169, 3
    %vm1280 = vcmp.eq.s32.totalorder %v1170, 3
    %vm1281 = vcmp.eq.s32.totalorder %v1171, 3
    %vm1282 = vcmp.eq.s32.totalorder %v1172, 3
    %vm1283 = vcmp.eq.s32.totalorder %v1173, 3
    %v1284 = vsel %vm1276, 1, 0
    %v1285 = vsel %vm1277, 1, 0
    %v1286 = vsel %vm1278, 1, 0
    %v1287 = vsel %vm1279, 1, 0
    %v1288 = vsel %vm1280, 1, 0
    %v1289 = vsel %vm1281, 1, 0
    %v1290 = vsel %vm1282, 1, 0
    %v1291 = vsel %vm1283, 1, 0
    %1292 = vset.pattern.permute.xlu0 0
    %1293 = vperm.xlu0 %1292, %v1284
    %v1294 = vpop.permute.xlu0 %1293
    %1295 = vset.pattern.permute.xlu0 0
    %1296 = vperm.xlu0 %1295, %v1285
    %v1297 = vpop.permute.xlu0 %1296
    %1298 = vset.pattern.permute.xlu0 0
    %1299 = vperm.xlu0 %1298, %v1286
    %v1300 = vpop.permute.xlu0 %1299
    %1301 = vset.pattern.permute.xlu0 0
    %1302 = vperm.xlu0 %1301, %v1287
    %v1303 = vpop.permute.xlu0 %1302
    %1304 = vset.pattern.permute.xlu0 0
    %1305 = vperm.xlu0 %1304, %v1288
    %v1306 = vpop.permute.xlu0 %1305
    %1307 = vset.pattern.permute.xlu0 0
    %1308 = vperm.xlu0 %1307, %v1289
    %v1309 = vpop.permute.xlu0 %1308
    %1310 = vset.pattern.permute.xlu0 0
    %1311 = vperm.xlu0 %1310, %v1290
    %v1312 = vpop.permute.xlu0 %1311
    %1313 = vset.pattern.permute.xlu0 0
    %1314 = vperm.xlu0 %1313, %v1291
    %v1315 = vpop.permute.xlu0 %1314
    %vm1316 = vcmp.eq.s32.totalorder %v1294, 1
    %vm1317 = vcmp.eq.s32.totalorder %v1297, 1
    %vm1318 = vcmp.eq.s32.totalorder %v1300, 1
    %vm1319 = vcmp.eq.s32.totalorder %v1303, 1
    %vm1320 = vcmp.eq.s32.totalorder %v1306, 1
    %vm1321 = vcmp.eq.s32.totalorder %v1309, 1
    %vm1322 = vcmp.eq.s32.totalorder %v1312, 1
    %vm1323 = vcmp.eq.s32.totalorder %v1315, 1
    %v1324 = vlaneseq
    %v1325 = vshrl.u32 %v1324, 7
    %v1326 = vsub.s32 3, %v1325
    %v1327 = vrot.slane %v1174, %v1326
    %v1328 = vlaneseq
    %v1329 = vshrl.u32 %v1328, 7
    %v1330 = vsub.s32 7, %v1329
    %v1331 = vrot.slane %v1174, %v1330
    %v1334 = vlaneseq
    %v1335 = vshrl.u32 %v1334, 7
    %v1336 = vsub.s32 3, %v1335
    %v1337 = vrot.slane %v1327, %v1336
    %v1338 = vlaneseq
    %v1339 = vshrl.u32 %v1338, 7
    %v1340 = vsub.s32 3, %v1339
    %v1341 = vrot.slane %v1331, %v1340
    %v1342 = vlaneseq
    %v1343 = vshrl.u32 %v1342, 7
    %v1344 = vsub.s32 2, %v1343
    %v1345 = vrot.slane %v1174, %v1344
    %v1346 = vlaneseq
    %v1347 = vshrl.u32 %v1346, 7
    %v1348 = vsub.s32 6, %v1347
    %v1349 = vrot.slane %v1174, %v1348
    %v1352 = vlaneseq
    %v1353 = vshrl.u32 %v1352, 7
    %v1354 = vsub.s32 2, %v1353
    %v1355 = vrot.slane %v1345, %v1354
    %v1356 = vlaneseq
    %v1357 = vshrl.u32 %v1356, 7
    %v1358 = vsub.s32 2, %v1357
    %v1359 = vrot.slane %v1349, %v1358
    %v1360 = vsel %vm1316, %v1337, %v1355
    %v1361 = vsel %vm1316, %v1341, %v1359
    %v1362 = vsel %vm1317, %v1337, %v1355
    %v1363 = vsel %vm1317, %v1341, %v1359
    %v1364 = vsel %vm1318, %v1337, %v1355
    %v1365 = vsel %vm1318, %v1341, %v1359
    %v1366 = vsel %vm1319, %v1337, %v1355
    %v1367 = vsel %vm1319, %v1341, %v1359
    %v1368 = vsel %vm1320, %v1337, %v1355
    %v1369 = vsel %vm1320, %v1341, %v1359
    %v1370 = vsel %vm1321, %v1337, %v1355
    %v1371 = vsel %vm1321, %v1341, %v1359
    %v1372 = vsel %vm1322, %v1337, %v1355
    %v1373 = vsel %vm1322, %v1341, %v1359
    %v1374 = vsel %vm1323, %v1337, %v1355
    %v1375 = vsel %vm1323, %v1341, %v1359
    %vm1376 = vcmp.ge.s32.totalorder %v1166, 2
    %vm1377 = vcmp.ge.s32.totalorder %v1167, 2
    %vm1378 = vcmp.ge.s32.totalorder %v1168, 2
    %vm1379 = vcmp.ge.s32.totalorder %v1169, 2
    %vm1380 = vcmp.ge.s32.totalorder %v1170, 2
    %vm1381 = vcmp.ge.s32.totalorder %v1171, 2
    %vm1382 = vcmp.ge.s32.totalorder %v1172, 2
    %vm1383 = vcmp.ge.s32.totalorder %v1173, 2
    %v1384 = vsel %vm1376, 1, 0
    %v1385 = vsel %vm1377, 1, 0
    %v1386 = vsel %vm1378, 1, 0
    %v1387 = vsel %vm1379, 1, 0
    %v1388 = vsel %vm1380, 1, 0
    %v1389 = vsel %vm1381, 1, 0
    %v1390 = vsel %vm1382, 1, 0
    %v1391 = vsel %vm1383, 1, 0
    %1392 = vset.pattern.permute.xlu0 0
    %1393 = vperm.xlu0 %1392, %v1384
    %v1394 = vpop.permute.xlu0 %1393
    %1395 = vset.pattern.permute.xlu0 0
    %1396 = vperm.xlu0 %1395, %v1385
    %v1397 = vpop.permute.xlu0 %1396
    %1398 = vset.pattern.permute.xlu0 0
    %1399 = vperm.xlu0 %1398, %v1386
    %v1400 = vpop.permute.xlu0 %1399
    %1401 = vset.pattern.permute.xlu0 0
    %1402 = vperm.xlu0 %1401, %v1387
    %v1403 = vpop.permute.xlu0 %1402
    %1404 = vset.pattern.permute.xlu0 0
    %1405 = vperm.xlu0 %1404, %v1388
    %v1406 = vpop.permute.xlu0 %1405
    %1407 = vset.pattern.permute.xlu0 0
    %1408 = vperm.xlu0 %1407, %v1389
    %v1409 = vpop.permute.xlu0 %1408
    %1410 = vset.pattern.permute.xlu0 0
    %1411 = vperm.xlu0 %1410, %v1390
    %v1412 = vpop.permute.xlu0 %1411
    %1413 = vset.pattern.permute.xlu0 0
    %1414 = vperm.xlu0 %1413, %v1391
    %v1415 = vpop.permute.xlu0 %1414
    %vm1416 = vcmp.eq.s32.totalorder %v1394, 1
    %vm1417 = vcmp.eq.s32.totalorder %v1397, 1
    %vm1418 = vcmp.eq.s32.totalorder %v1400, 1
    %vm1419 = vcmp.eq.s32.totalorder %v1403, 1
    %vm1420 = vcmp.eq.s32.totalorder %v1406, 1
    %vm1421 = vcmp.eq.s32.totalorder %v1409, 1
    %vm1422 = vcmp.eq.s32.totalorder %v1412, 1
    %vm1423 = vcmp.eq.s32.totalorder %v1415, 1
    %v1424 = vsel %vm1416, %v1360, %v1260
    %v1425 = vsel %vm1416, %v1361, %v1261
    %v1426 = vsel %vm1417, %v1362, %v1262
    %v1427 = vsel %vm1417, %v1363, %v1263
    %v1428 = vsel %vm1418, %v1364, %v1264
    %v1429 = vsel %vm1418, %v1365, %v1265
    %v1430 = vsel %vm1419, %v1366, %v1266
    %v1431 = vsel %vm1419, %v1367, %v1267
    %v1432 = vsel %vm1420, %v1368, %v1268
    %v1433 = vsel %vm1420, %v1369, %v1269
    %v1434 = vsel %vm1421, %v1370, %v1270
    %v1435 = vsel %vm1421, %v1371, %v1271
    %v1436 = vsel %vm1422, %v1372, %v1272
    %v1437 = vsel %vm1422, %v1373, %v1273
    %v1438 = vsel %vm1423, %v1374, %v1274
    %v1439 = vsel %vm1423, %v1375, %v1275
    %v1440 = vadd.f32 %v1128, %v1424
    %v1441 = vadd.f32 %v1130, %v1425
    %v1442 = vadd.f32 %v1132, %v1426
    %v1443 = vadd.f32 %v1134, %v1427
    %v1444 = vadd.f32 %v1138, %v1428
    %v1445 = vadd.f32 %v1140, %v1429
    %v1446 = vadd.f32 %v1142, %v1430
    %v1447 = vadd.f32 %v1144, %v1431
    %v1448 = vadd.f32 %v1148, %v1432
    %v1449 = vadd.f32 %v1150, %v1433
    %v1450 = vadd.f32 %v1152, %v1434
    %v1451 = vadd.f32 %v1154, %v1435
    %v1452 = vadd.f32 %v1158, %v1436
    %v1453 = vadd.f32 %v1160, %v1437
    %v1454 = vadd.f32 %v1162, %v1438
    %v1455 = vadd.f32 %v1164, %v1439
    %v1456 = vpack.c.bf16 %v1442, %v1440
    %v1457 = vpack.c.bf16 %v1443, %v1441
    %v1458 = vpack.c.bf16 %v1446, %v1444
    %v1459 = vpack.c.bf16 %v1447, %v1445
    %v1460 = vpack.c.bf16 %v1450, %v1448
    %v1461 = vpack.c.bf16 %v1451, %v1449
    %v1462 = vpack.c.bf16 %v1454, %v1452
    %v1463 = vpack.c.bf16 %v1455, %v1453
    %v1464 = vld [vmem:[#allocation11] sm:$0xff]
    %v1465 = vld [vmem:[#allocation11 + $0x8] sm:$0xff]
    %v1466 = vld [vmem:[#allocation11 + $0x10] sm:$0xff]
    %v1467 = vld [vmem:[#allocation11 + $0x18] sm:$0xff]
    %v1468 = vld [vmem:[#allocation11 + $0x20] sm:$0xff]
    %v1469 = vld [vmem:[#allocation11 + $0x28] sm:$0xff]
    %v1470 = vld [vmem:[#allocation11 + $0x30] sm:$0xff]
    %v1471 = vld [vmem:[#allocation11 + $0x38] sm:$0xff]
    %v1472 = vld [vmem:[#allocation11 + $0x40] sm:$0xff]
    %v1473 = vld [vmem:[#allocation11 + $0x48] sm:$0xff]
    %v1474 = vld [vmem:[#allocation11 + $0x50] sm:$0xff]
    %v1475 = vld [vmem:[#allocation11 + $0x58] sm:$0xff]
    %v1476 = vld [vmem:[#allocation11 + $0x60] sm:$0xff]
    %v1477 = vld [vmem:[#allocation11 + $0x68] sm:$0xff]
    %v1478 = vld [vmem:[#allocation11 + $0x70] sm:$0xff]
    %v1479 = vld [vmem:[#allocation11 + $0x78] sm:$0xff]
    %v1480 = vld [vmem:[#allocation11 + $0x80] sm:$0xff]
    %v1481 = vld [vmem:[#allocation11 + $0x88] sm:$0xff]
    %v1482 = vld [vmem:[#allocation11 + $0x90] sm:$0xff]
    %v1483 = vld [vmem:[#allocation11 + $0x98] sm:$0xff]
    %v1484 = vld [vmem:[#allocation11 + $0xa0] sm:$0xff]
    %v1485 = vld [vmem:[#allocation11 + $0xa8] sm:$0xff]
    %v1486 = vld [vmem:[#allocation11 + $0xb0] sm:$0xff]
    %v1487 = vld [vmem:[#allocation11 + $0xb8] sm:$0xff]
    %v1488 = vld [vmem:[#allocation11 + $0xc0] sm:$0xff]
    %v1489 = vld [vmem:[#allocation11 + $0xc8] sm:$0xff]
    %v1490 = vld [vmem:[#allocation11 + $0xd0] sm:$0xff]
    %v1491 = vld [vmem:[#allocation11 + $0xd8] sm:$0xff]
    %v1492 = vld [vmem:[#allocation11 + $0xe0] sm:$0xff]
    %v1493 = vld [vmem:[#allocation11 + $0xe8] sm:$0xff]
    %v1494 = vld [vmem:[#allocation11 + $0xf0] sm:$0xff]
    %v1495 = vld [vmem:[#allocation11 + $0xf8] sm:$0xff]
    %v1496 = vld [vmem:[%s12] sm:$0x3]
    %v1498 = vlaneseq
    %v1499 = vshrl.u32 %v1498, 7
    %v1500 = vsub.s32 0, %v1499
    %v1501 = vrot.slane %v1496, %v1500
    %v1502 = vlaneseq
    %v1503 = vshrl.u32 %v1502, 7
    %v1504 = vsub.s32 1, %v1503
    %v1505 = vrot.slane %v1496, %v1504
    %v1540 = vunpack.c.l.b16 %v1464
    %v1541 = vunpack.c.h.b16 %v1464
    %v1542 = vunpack.c.l.b16 %v1465
    %v1543 = vunpack.c.h.b16 %v1465
    %v1544 = vunpack.c.l.b16 %v1466
    %v1545 = vunpack.c.h.b16 %v1466
    %v1546 = vunpack.c.l.b16 %v1467
    %v1547 = vunpack.c.h.b16 %v1467
    %v1548 = vunpack.c.l.b16 %v1468
    %v1549 = vunpack.c.h.b16 %v1468
    %v1550 = vunpack.c.l.b16 %v1469
    %v1551 = vunpack.c.h.b16 %v1469
    %v1552 = vunpack.c.l.b16 %v1470
    %v1553 = vunpack.c.h.b16 %v1470
    %v1554 = vunpack.c.l.b16 %v1471
    %v1555 = vunpack.c.h.b16 %v1471
    %v1556 = vunpack.c.l.b16 %v1472
    %v1557 = vunpack.c.h.b16 %v1472
    %v1558 = vunpack.c.l.b16 %v1473
    %v1559 = vunpack.c.h.b16 %v1473
    %v1560 = vunpack.c.l.b16 %v1474
    %v1561 = vunpack.c.h.b16 %v1474
    %v1562 = vunpack.c.l.b16 %v1475
    %v1563 = vunpack.c.h.b16 %v1475
    %v1564 = vunpack.c.l.b16 %v1476
    %v1565 = vunpack.c.h.b16 %v1476
    %v1566 = vunpack.c.l.b16 %v1477
    %v1567 = vunpack.c.h.b16 %v1477
    %v1568 = vunpack.c.l.b16 %v1478
    %v1569 = vunpack.c.h.b16 %v1478
    %v1570 = vunpack.c.l.b16 %v1479
    %v1571 = vunpack.c.h.b16 %v1479
    %v1572 = vunpack.c.l.b16 %v1480
    %v1573 = vunpack.c.h.b16 %v1480
    %v1574 = vunpack.c.l.b16 %v1481
    %v1575 = vunpack.c.h.b16 %v1481
    %v1576 = vunpack.c.l.b16 %v1482
    %v1577 = vunpack.c.h.b16 %v1482
    %v1578 = vunpack.c.l.b16 %v1483
    %v1579 = vunpack.c.h.b16 %v1483
    %v1580 = vunpack.c.l.b16 %v1484
    %v1581 = vunpack.c.h.b16 %v1484
    %v1582 = vunpack.c.l.b16 %v1485
    %v1583 = vunpack.c.h.b16 %v1485
    %v1584 = vunpack.c.l.b16 %v1486
    %v1585 = vunpack.c.h.b16 %v1486
    %v1586 = vunpack.c.l.b16 %v1487
    %v1587 = vunpack.c.h.b16 %v1487
    %v1588 = vunpack.c.l.b16 %v1488
    %v1589 = vunpack.c.h.b16 %v1488
    %v1590 = vunpack.c.l.b16 %v1489
    %v1591 = vunpack.c.h.b16 %v1489
    %v1592 = vunpack.c.l.b16 %v1490
    %v1593 = vunpack.c.h.b16 %v1490
    %v1594 = vunpack.c.l.b16 %v1491
    %v1595 = vunpack.c.h.b16 %v1491
    %v1596 = vunpack.c.l.b16 %v1492
    %v1597 = vunpack.c.h.b16 %v1492
    %v1598 = vunpack.c.l.b16 %v1493
    %v1599 = vunpack.c.h.b16 %v1493
    %v1600 = vunpack.c.l.b16 %v1494
    %v1601 = vunpack.c.h.b16 %v1494
    %v1602 = vunpack.c.l.b16 %v1495
    %v1603 = vunpack.c.h.b16 %v1495
    %v1604 = vpack.c.b16 %v1542, %v1540
    %v1605 = vpack.c.b16 %v1543, %v1541
    %v1606 = vpack.c.b16 %v1546, %v1544
    %v1607 = vpack.c.b16 %v1547, %v1545
    %v1608 = vpack.c.b16 %v1550, %v1548
    %v1609 = vpack.c.b16 %v1551, %v1549
    %v1610 = vpack.c.b16 %v1554, %v1552
    %v1611 = vpack.c.b16 %v1555, %v1553
    %v1612 = vpack.c.b16 %v1558, %v1556
    %v1613 = vpack.c.b16 %v1559, %v1557
    %v1614 = vpack.c.b16 %v1562, %v1560
    %v1615 = vpack.c.b16 %v1563, %v1561
    %v1616 = vpack.c.b16 %v1566, %v1564
    %v1617 = vpack.c.b16 %v1567, %v1565
    %v1618 = vpack.c.b16 %v1570, %v1568
    %v1619 = vpack.c.b16 %v1571, %v1569
    %v1620 = vpack.c.b16 %v1574, %v1572
    %v1621 = vpack.c.b16 %v1575, %v1573
    %v1622 = vpack.c.b16 %v1578, %v1576
    %v1623 = vpack.c.b16 %v1579, %v1577
    %v1624 = vpack.c.b16 %v1582, %v1580
    %v1625 = vpack.c.b16 %v1583, %v1581
    %v1626 = vpack.c.b16 %v1586, %v1584
    %v1627 = vpack.c.b16 %v1587, %v1585
    %v1628 = vpack.c.b16 %v1590, %v1588
    %v1629 = vpack.c.b16 %v1591, %v1589
    %v1630 = vpack.c.b16 %v1594, %v1592
    %v1631 = vpack.c.b16 %v1595, %v1593
    %v1632 = vpack.c.b16 %v1598, %v1596
    %v1633 = vpack.c.b16 %v1599, %v1597
    %v1634 = vpack.c.b16 %v1602, %v1600
    %v1635 = vpack.c.b16 %v1603, %v1601
    %1668 = vmatprep.subr.bf16.mxu0 %v1605
    %1669 = vmatpush1.bf16.msra.mxu0 %v1604
    %1670 = vmatprep.subr.bf16.mxu0 %v1607
    %1671 = vmatpush1.bf16.msra.mxu0 %v1606
    %1672 = vmatprep.subr.bf16.mxu0 %v1609
    %1673 = vmatpush1.bf16.msra.mxu0 %v1608
    %1674 = vmatprep.subr.bf16.mxu0 %v1611
    %1675 = vmatpush1.bf16.msra.mxu0 %v1610
    %1676 = vmatprep.subr.bf16.mxu0 %v1613
    %1677 = vmatpush1.bf16.msra.mxu0 %v1612
    %1678 = vmatprep.subr.bf16.mxu0 %v1615
    %1679 = vmatpush1.bf16.msra.mxu0 %v1614
    %1680 = vmatprep.subr.bf16.mxu0 %v1617
    %1681 = vmatpush1.bf16.msra.mxu0 %v1616
    %1682 = vmatprep.subr.bf16.mxu0 %v1619
    %1683 = vmatpush1.bf16.msra.mxu0 %v1618
    %1684 = vmatprep.subr.bf16.mxu0 %v1621
    %1685 = vmatpush1.bf16.msra.mxu0 %v1620
    %1686 = vmatprep.subr.bf16.mxu0 %v1623
    %1687 = vmatpush1.bf16.msra.mxu0 %v1622
    %1688 = vmatprep.subr.bf16.mxu0 %v1625
    %1689 = vmatpush1.bf16.msra.mxu0 %v1624
    %1690 = vmatprep.subr.bf16.mxu0 %v1627
    %1691 = vmatpush1.bf16.msra.mxu0 %v1626
    %1692 = vmatprep.subr.bf16.mxu0 %v1629
    %1693 = vmatpush1.bf16.msra.mxu0 %v1628
    %1694 = vmatprep.subr.bf16.mxu0 %v1631
    %1695 = vmatpush1.bf16.msra.mxu0 %v1630
    %1696 = vmatprep.subr.bf16.mxu0 %v1633
    %1697 = vmatpush1.bf16.msra.mxu0 %v1632
    %1698 = vmatprep.subr.bf16.mxu0 %v1635
    %1699 = vmatpush1.bf16.msra.mxu0 %v1634
    %1700 = vmatprep.mubr.bf16.mxu0 %v1457
    %1701 = vmatmul.mubr.bf16.gmra.mrb[0].mxu0 %v1456
    %v1702 = vpop.f32.mrb[0].mxu0
    %v1703 = vadd.f32 %v1501, %v1702
    %v1704 = vpop.f32.mrb[0].mxu0
    %v1705 = vadd.f32 %v1505, %v1704
    %v1706 = vpop.f32.mrb[0].mxu0
    %v1707 = vadd.f32 %v1501, %v1706
    %v1708 = vpop.f32.mrb[0].mxu0
    %v1709 = vadd.f32 %v1505, %v1708
    %1710 = vmatprep.mubr.bf16.mxu0 %v1459
    %1711 = vmatmul.mubr.bf16.gmra.mrb[0].mxu0 %v1458
    %v1712 = vpop.f32.mrb[0].mxu0
    %v1713 = vadd.f32 %v1501, %v1712
    %v1714 = vpop.f32.mrb[0].mxu0
    %v1715 = vadd.f32 %v1505, %v1714
    %v1716 = vpop.f32.mrb[0].mxu0
    %v1717 = vadd.f32 %v1501, %v1716
    %v1718 = vpop.f32.mrb[0].mxu0
    %v1719 = vadd.f32 %v1505, %v1718
    %1720 = vmatprep.mubr.bf16.mxu0 %v1461
    %1721 = vmatmul.mubr.bf16.gmra.mrb[0].mxu0 %v1460
    %v1722 = vpop.f32.mrb[0].mxu0
    %v1723 = vadd.f32 %v1501, %v1722
    %v1724 = vpop.f32.mrb[0].mxu0
    %v1725 = vadd.f32 %v1505, %v1724
    %v1726 = vpop.f32.mrb[0].mxu0
    %v1727 = vadd.f32 %v1501, %v1726
    %v1728 = vpop.f32.mrb[0].mxu0
    %v1729 = vadd.f32 %v1505, %v1728
    %1730 = vmatprep.mubr.bf16.mxu0 %v1463
    %1731 = vmatmul.mubr.bf16.gmra.mrb[0].mxu0 %v1462
    %v1732 = vpop.f32.mrb[0].mxu0
    %v1733 = vadd.f32 %v1501, %v1732
    %v1734 = vpop.f32.mrb[0].mxu0
    %v1735 = vadd.f32 %v1505, %v1734
    %v1736 = vpop.f32.mrb[0].mxu0
    %v1737 = vadd.f32 %v1501, %v1736
    %v1738 = vpop.f32.mrb[0].mxu0
    %v1739 = vadd.f32 %v1505, %v1738
    %1740 = vdwg.mxu0
    %v1741 = vmax.f32 %v1703, 0.0
    %v1742 = vmax.f32 %v1705, 0.0
    %v1743 = vmax.f32 %v1707, 0.0
    %v1744 = vmax.f32 %v1709, 0.0
    %v1745 = vmax.f32 %v1713, 0.0
    %v1746 = vmax.f32 %v1715, 0.0
    %v1747 = vmax.f32 %v1717, 0.0
    %v1748 = vmax.f32 %v1719, 0.0
    %v1749 = vmax.f32 %v1723, 0.0
    %v1750 = vmax.f32 %v1725, 0.0
    %v1751 = vmax.f32 %v1727, 0.0
    %v1752 = vmax.f32 %v1729, 0.0
    %v1753 = vmax.f32 %v1733, 0.0
    %v1754 = vmax.f32 %v1735, 0.0
    %v1755 = vmax.f32 %v1737, 0.0
    %v1756 = vmax.f32 %v1739, 0.0
    %v1757 = vpack.c.bf16 %v1743, %v1741
    %v1758 = vpack.c.bf16 %v1744, %v1742
    %v1759 = vpack.c.bf16 %v1747, %v1745
    %v1760 = vpack.c.bf16 %v1748, %v1746
    %v1761 = vpack.c.bf16 %v1751, %v1749
    %v1762 = vpack.c.bf16 %v1752, %v1750
    %v1763 = vpack.c.bf16 %v1755, %v1753
    %v1764 = vpack.c.bf16 %v1756, %v1754
    %v1765 = vld [vmem:[#allocation13] sm:$0xff]
    %v1766 = vld [vmem:[#allocation13 + $0x8] sm:$0xff]
    %v1767 = vld [vmem:[#allocation13 + $0x10] sm:$0xff]
    %v1768 = vld [vmem:[#allocation13 + $0x18] sm:$0xff]
    %v1769 = vld [vmem:[#allocation13 + $0x20] sm:$0xff]
    %v1770 = vld [vmem:[#allocation13 + $0x28] sm:$0xff]
    %v1771 = vld [vmem:[#allocation13 + $0x30] sm:$0xff]
    %v1772 = vld [vmem:[#allocation13 + $0x38] sm:$0xff]
    %v1773 = vld [vmem:[#allocation13 + $0x40] sm:$0xff]
    %v1774 = vld [vmem:[#allocation13 + $0x48] sm:$0xff]
    %v1775 = vld [vmem:[#allocation13 + $0x50] sm:$0xff]
    %v1776 = vld [vmem:[#allocation13 + $0x58] sm:$0xff]
    %v1777 = vld [vmem:[#allocation13 + $0x60] sm:$0xff]
    %v1778 = vld [vmem:[#allocation13 + $0x68] sm:$0xff]
    %v1779 = vld [vmem:[#allocation13 + $0x70] sm:$0xff]
    %v1780 = vld [vmem:[#allocation13 + $0x78] sm:$0xff]
    %v1781 = vld [vmem:[#allocation13 + $0x80] sm:$0xff]
    %v1782 = vld [vmem:[#allocation13 + $0x88] sm:$0xff]
    %v1783 = vld [vmem:[#allocation13 + $0x90] sm:$0xff]
    %v1784 = vld [vmem:[#allocation13 + $0x98] sm:$0xff]
    %v1785 = vld [vmem:[#allocation13 + $0xa0] sm:$0xff]
    %v1786 = vld [vmem:[#allocation13 + $0xa8] sm:$0xff]
    %v1787 = vld [vmem:[#allocation13 + $0xb0] sm:$0xff]
    %v1788 = vld [vmem:[#allocation13 + $0xb8] sm:$0xff]
    %v1789 = vld [vmem:[#allocation13 + $0xc0] sm:$0xff]
    %v1790 = vld [vmem:[#allocation13 + $0xc8] sm:$0xff]
    %v1791 = vld [vmem:[#allocation13 + $0xd0] sm:$0xff]
    %v1792 = vld [vmem:[#allocation13 + $0xd8] sm:$0xff]
    %v1793 = vld [vmem:[#allocation13 + $0xe0] sm:$0xff]
    %v1794 = vld [vmem:[#allocation13 + $0xe8] sm:$0xff]
    %v1795 = vld [vmem:[#allocation13 + $0xf0] sm:$0xff]
    %v1796 = vld [vmem:[#allocation13 + $0xf8] sm:$0xff]
    %v1797 = vld [vmem:[%s14] sm:$0x3]
    %v1799 = vlaneseq
    %v1800 = vshrl.u32 %v1799, 7
    %v1801 = vsub.s32 0, %v1800
    %v1802 = vrot.slane %v1797, %v1801
    %v1803 = vlaneseq
    %v1804 = vshrl.u32 %v1803, 7
    %v1805 = vsub.s32 1, %v1804
    %v1806 = vrot.slane %v1797, %v1805
    %v1841 = vunpack.c.l.b16 %v1765
    %v1842 = vunpack.c.h.b16 %v1765
    %v1843 = vunpack.c.l.b16 %v1766
    %v1844 = vunpack.c.h.b16 %v1766
    %v1845 = vunpack.c.l.b16 %v1767
    %v1846 = vunpack.c.h.b16 %v1767
    %v1847 = vunpack.c.l.b16 %v1768
    %v1848 = vunpack.c.h.b16 %v1768
    %v1849 = vunpack.c.l.b16 %v1769
    %v1850 = vunpack.c.h.b16 %v1769
    %v1851 = vunpack.c.l.b16 %v1770
    %v1852 = vunpack.c.h.b16 %v1770
    %v1853 = vunpack.c.l.b16 %v1771
    %v1854 = vunpack.c.h.b16 %v1771
    %v1855 = vunpack.c.l.b16 %v1772
    %v1856 = vunpack.c.h.b16 %v1772
    %v1857 = vunpack.c.l.b16 %v1773
    %v1858 = vunpack.c.h.b16 %v1773
    %v1859 = vunpack.c.l.b16 %v1774
    %v1860 = vunpack.c.h.b16 %v1774
    %v1861 = vunpack.c.l.b16 %v1775
    %v1862 = vunpack.c.h.b16 %v1775
    %v1863 = vunpack.c.l.b16 %v1776
    %v1864 = vunpack.c.h.b16 %v1776
    %v1865 = vunpack.c.l.b16 %v1777
    %v1866 = vunpack.c.h.b16 %v1777
    %v1867 = vunpack.c.l.b16 %v1778
    %v1868 = vunpack.c.h.b16 %v1778
    %v1869 = vunpack.c.l.b16 %v1779
    %v1870 = vunpack.c.h.b16 %v1779
    %v1871 = vunpack.c.l.b16 %v1780
    %v1872 = vunpack.c.h.b16 %v1780
    %v1873 = vunpack.c.l.b16 %v1781
    %v1874 = vunpack.c.h.b16 %v1781
    %v1875 = vunpack.c.l.b16 %v1782
    %v1876 = vunpack.c.h.b16 %v1782
    %v1877 = vunpack.c.l.b16 %v1783
    %v1878 = vunpack.c.h.b16 %v1783
    %v1879 = vunpack.c.l.b16 %v1784
    %v1880 = vunpack.c.h.b16 %v1784
    %v1881 = vunpack.c.l.b16 %v1785
    %v1882 = vunpack.c.h.b16 %v1785
    %v1883 = vunpack.c.l.b16 %v1786
    %v1884 = vunpack.c.h.b16 %v1786
    %v1885 = vunpack.c.l.b16 %v1787
    %v1886 = vunpack.c.h.b16 %v1787
    %v1887 = vunpack.c.l.b16 %v1788
    %v1888 = vunpack.c.h.b16 %v1788
    %v1889 = vunpack.c.l.b16 %v1789
    %v1890 = vunpack.c.h.b16 %v1789
    %v1891 = vunpack.c.l.b16 %v1790
    %v1892 = vunpack.c.h.b16 %v1790
    %v1893 = vunpack.c.l.b16 %v1791
    %v1894 = vunpack.c.h.b16 %v1791
    %v1895 = vunpack.c.l.b16 %v1792
    %v1896 = vunpack.c.h.b16 %v1792
    %v1897 = vunpack.c.l.b16 %v1793
    %v1898 = vunpack.c.h.b16 %v1793
    %v1899 = vunpack.c.l.b16 %v1794
    %v1900 = vunpack.c.h.b16 %v1794
    %v1901 = vunpack.c.l.b16 %v1795
    %v1902 = vunpack.c.h.b16 %v1795
    %v1903 = vunpack.c.l.b16 %v1796
    %v1904 = vunpack.c.h.b16 %v1796
    %v1905 = vpack.c.b16 %v1843, %v1841
    %v1906 = vpack.c.b16 %v1844, %v1842
    %v1907 = vpack.c.b16 %v1847, %v1845
    %v1908 = vpack.c.b16 %v1848, %v1846
    %v1909 = vpack.c.b16 %v1851, %v1849
    %v1910 = vpack.c.b16 %v1852, %v1850
    %v1911 = vpack.c.b16 %v1855, %v1853
    %v1912 = vpack.c.b16 %v1856, %v1854
    %v1913 = vpack.c.b16 %v1859, %v1857
    %v1914 = vpack.c.b16 %v1860, %v1858
    %v1915 = vpack.c.b16 %v1863, %v1861
    %v1916 = vpack.c.b16 %v1864, %v1862
    %v1917 = vpack.c.b16 %v1867, %v1865
    %v1918 = vpack.c.b16 %v1868, %v1866
    %v1919 = vpack.c.b16 %v1871, %v1869
    %v1920 = vpack.c.b16 %v1872, %v1870
    %v1921 = vpack.c.b16 %v1875, %v1873
    %v1922 = vpack.c.b16 %v1876, %v1874
    %v1923 = vpack.c.b16 %v1879, %v1877
    %v1924 = vpack.c.b16 %v1880, %v1878
    %v1925 = vpack.c.b16 %v1883, %v1881
    %v1926 = vpack.c.b16 %v1884, %v1882
    %v1927 = vpack.c.b16 %v1887, %v1885
    %v1928 = vpack.c.b16 %v1888, %v1886
    %v1929 = vpack.c.b16 %v1891, %v1889
    %v1930 = vpack.c.b16 %v1892, %v1890
    %v1931 = vpack.c.b16 %v1895, %v1893
    %v1932 = vpack.c.b16 %v1896, %v1894
    %v1933 = vpack.c.b16 %v1899, %v1897
    %v1934 = vpack.c.b16 %v1900, %v1898
    %v1935 = vpack.c.b16 %v1903, %v1901
    %v1936 = vpack.c.b16 %v1904, %v1902
    %1969 = vmatprep.subr.bf16.mxu0 %v1906
    %1970 = vmatpush1.bf16.msra.mxu0 %v1905
    %1971 = vmatprep.subr.bf16.mxu0 %v1908
    %1972 = vmatpush1.bf16.msra.mxu0 %v1907
    %1973 = vmatprep.subr.bf16.mxu0 %v1910
    %1974 = vmatpush1.bf16.msra.mxu0 %v1909
    %1975 = vmatprep.subr.bf16.mxu0 %v1912
    %1976 = vmatpush1.bf16.msra.mxu0 %v1911
    %1977 = vmatprep.subr.bf16.mxu0 %v1914
    %1978 = vmatpush1.bf16.msra.mxu0 %v1913
    %1979 = vmatprep.subr.bf16.mxu0 %v1916
    %1980 = vmatpush1.bf16.msra.mxu0 %v1915
    %1981 = vmatprep.subr.bf16.mxu0 %v1918
    %1982 = vmatpush1.bf16.msra.mxu0 %v1917
    %1983 = vmatprep.subr.bf16.mxu0 %v1920
    %1984 = vmatpush1.bf16.msra.mxu0 %v1919
    %1985 = vmatprep.subr.bf16.mxu0 %v1922
    %1986 = vmatpush1.bf16.msra.mxu0 %v1921
    %1987 = vmatprep.subr.bf16.mxu0 %v1924
    %1988 = vmatpush1.bf16.msra.mxu0 %v1923
    %1989 = vmatprep.subr.bf16.mxu0 %v1926
    %1990 = vmatpush1.bf16.msra.mxu0 %v1925
    %1991 = vmatprep.subr.bf16.mxu0 %v1928
    %1992 = vmatpush1.bf16.msra.mxu0 %v1927
    %1993 = vmatprep.subr.bf16.mxu0 %v1930
    %1994 = vmatpush1.bf16.msra.mxu0 %v1929
    %1995 = vmatprep.subr.bf16.mxu0 %v1932
    %1996 = vmatpush1.bf16.msra.mxu0 %v1931
    %1997 = vmatprep.subr.bf16.mxu0 %v1934
    %1998 = vmatpush1.bf16.msra.mxu0 %v1933
    %1999 = vmatprep.subr.bf16.mxu0 %v1936
    %2000 = vmatpush1.bf16.msra.mxu0 %v1935
    %2001 = vmatprep.mubr.bf16.mxu0 %v1758
    %2002 = vmatmul.mubr.bf16.gmra.mrb[0].mxu0 %v1757
    %v2003 = vpop.f32.mrb[0].mxu0
    %v2004 = vadd.f32 %v1802, %v2003
    %v2005 = vpop.f32.mrb[0].mxu0
    %v2006 = vadd.f32 %v1806, %v2005
    %v2007 = vpop.f32.mrb[0].mxu0
    %v2008 = vadd.f32 %v1802, %v2007
    %v2009 = vpop.f32.mrb[0].mxu0
    %v2010 = vadd.f32 %v1806, %v2009
    %2011 = vmatprep.mubr.bf16.mxu0 %v1760
    %2012 = vmatmul.mubr.bf16.gmra.mrb[0].mxu0 %v1759
    %v2013 = vpop.f32.mrb[0].mxu0
    %v2014 = vadd.f32 %v1802, %v2013
    %v2015 = vpop.f32.mrb[0].mxu0
    %v2016 = vadd.f32 %v1806, %v2015
    %v2017 = vpop.f32.mrb[0].mxu0
    %v2018 = vadd.f32 %v1802, %v2017
    %v2019 = vpop.f32.mrb[0].mxu0
    %v2020 = vadd.f32 %v1806, %v2019
    %2021 = vmatprep.mubr.bf16.mxu0 %v1762
    %2022 = vmatmul.mubr.bf16.gmra.mrb[0].mxu0 %v1761
    %v2023 = vpop.f32.mrb[0].mxu0
    %v2024 = vadd.f32 %v1802, %v2023
    %v2025 = vpop.f32.mrb[0].mxu0
    %v2026 = vadd.f32 %v1806, %v2025
    %v2027 = vpop.f32.mrb[0].mxu0
    %v2028 = vadd.f32 %v1802, %v2027
    %v2029 = vpop.f32.mrb[0].mxu0
    %v2030 = vadd.f32 %v1806, %v2029
    %2031 = vmatprep.mubr.bf16.mxu0 %v1764
    %2032 = vmatmul.mubr.bf16.gmra.mrb[0].mxu0 %v1763
    %v2033 = vpop.f32.mrb[0].mxu0
    %v2034 = vadd.f32 %v1802, %v2033
    %v2035 = vpop.f32.mrb[0].mxu0
    %v2036 = vadd.f32 %v1806, %v2035
    %v2037 = vpop.f32.mrb[0].mxu0
    %v2038 = vadd.f32 %v1802, %v2037
    %v2039 = vpop.f32.mrb[0].mxu0
    %v2040 = vadd.f32 %v1806, %v2039
    %2041 = vdwg.mxu0
    %2042 = vst [vmem:[#allocation14] sm:$0xff] %v2004
    %2043 = vst [vmem:[#allocation14 + $0x8] sm:$0xff] %v2006
    %2044 = vst [vmem:[#allocation14 + $0x10] sm:$0xff] %v2008
    %2045 = vst [vmem:[#allocation14 + $0x18] sm:$0xff] %v2010
    %2046 = vst [vmem:[#allocation14 + $0x20] sm:$0xff] %v2014
    %2047 = vst [vmem:[#allocation14 + $0x28] sm:$0xff] %v2016
    %2048 = vst [vmem:[#allocation14 + $0x30] sm:$0xff] %v2018
    %2049 = vst [vmem:[#allocation14 + $0x38] sm:$0xff] %v2020
    %2050 = vst [vmem:[#allocation14 + $0x40] sm:$0xff] %v2024
    %2051 = vst [vmem:[#allocation14 + $0x48] sm:$0xff] %v2026
    %2052 = vst [vmem:[#allocation14 + $0x50] sm:$0xff] %v2028
    %2053 = vst [vmem:[#allocation14 + $0x58] sm:$0xff] %v2030
    %2054 = vst [vmem:[#allocation14 + $0x60] sm:$0xff] %v2034
    %2055 = vst [vmem:[#allocation14 + $0x68] sm:$0xff] %v2036
    %2056 = vst [vmem:[#allocation14 + $0x70] sm:$0xff] %v2038
    %2057 = vst [vmem:[#allocation14 + $0x78] sm:$0xff] %v2040
    // Predicated region
    $region90: #{tpu_custom_call.1} parent=1 // pred_check
      _
    $region91: #{tpu_custom_call.1} parent=1 // pred_check_branch
      %2059 = sbr.rel (0) target = $region93
    $region92: #{tpu_custom_call.1} parent=1 // pred_region
      %s2061 = ssub.s32 2048, 2048
      %2062 = vsyncadd [#allocation4], %s2061
      %s2063 = sshll.u32 [#allocation14], 4
      %s2064 = int_to_ptr.vmem [resolvable:$true] %s2063
      %2069 = dma.vmem_to_hbm [thread:$0]  %s2064, 2048, %s15, [#allocation4], 256, 256, 16
    $region93: #{tpu_custom_call.1} parent=1 // pred_fallthru
      _
    // Predicated region
    $region94: #{tpu_custom_call.1} parent=1 // pred_check
      _
    $region95: #{tpu_custom_call.1} parent=1 // pred_check_branch
      %2071 = sbr.rel (0) target = $region97
    $region96: #{tpu_custom_call.1} parent=1 // pred_region
      %2072 = dma.done [#allocation4], 2048
    $region97: #{tpu_custom_call.1} parent=1 // pred_fallthru
      _
    %2073 = vsyncpa [#allocation3], 1
    %2074 = vsyncpa [#allocation6], 1
    %2075 = vsyncpa [#allocation9], 1
    %2076 = vsyncpa [#allocation12], 1
    %2077 = vsyncpa [#allocation4], 1

</llo_original>
